<compile_context>
chip_gen: v7x
topology: tpu7x:2x2x1
jax: 0.10.0
libtpu: 0.0.40
codegen_flags: <defaults>
</compile_context>

<pallas_src>
import functools

import jax
import jax.numpy as jnp
from jax import lax
from jax.experimental import pallas as pl
from jax.experimental.pallas import tpu as pltpu


# ------------------------------ layout helpers -------------------------------

def _ru8(v):
    return (v + 7) // 8 * 8


def _ru128(v):
    return (v + 127) // 128 * 128


def _full_spec(shape):
    nd = len(shape)
    return pl.BlockSpec(shape, lambda i, _nd=nd: (0,) * _nd)


# ------------------------------- fused kernel --------------------------------

def ass_fused_kernel(x_ref, adj_ref,
                     emb_w_ref, emb_b_ref,
                     ass_w_ref, ass_b_ref,
                     wsrc_ref, wdst_ref, attb_ref,
                     w1_ref, b1_ref, w2_ref, b2_ref,
                     out_ns_ref, out_c_ref,
                     hlin_s, hass_s, edst_s, esrc_s, sall_s, eacc_s, stadj_s,
                     *, n, d, c, k, tr):
    f32 = jnp.float32
    i = pl.program_id(0)

    # ---- step 0: node-wise projections + accumulator init (runs once) --------
    @pl.when(i == 0)
    def _():
        x = x_ref[...]
        hlin_s[...] = (jnp.dot(x, emb_w_ref[...], preferred_element_type=f32)
                       + emb_b_ref[...])
        h_ass = (jnp.dot(x, ass_w_ref[...], preferred_element_type=f32)
                 + ass_b_ref[...])
        hass_s[...] = h_ass
        # fold the attention bias into the per-destination score once
        # (saves one full N^2 broadcast add per stripe)
        edst_s[...] = (jnp.dot(h_ass, wdst_ref[...], preferred_element_type=f32)
                       + attb_ref[...])
        # (1, N) per-source score in lane-dense row layout, no transpose
        esrc_s[...] = lax.dot_general(wsrc_ref[...], h_ass,
                                      (((0,), (1,)), ((), ())),
                                      preferred_element_type=f32)
        eacc_s[...] = jnp.zeros_like(eacc_s)
        stadj_s[...] = jnp.zeros_like(stadj_s)

    # ---- per-stripe work: TR destination rows x all N source columns ---------
    adj = adj_ref[...].astype(f32)          # bf16 stripe (0/1 exact), upcast once
    h_lin = hlin_s[...]
    h_ass = hass_s[...]
    row0 = pl.multiple_of(i * tr, tr)

    # GCN_emb: mean over incoming neighbours
    deg = jnp.sum(adj, axis=-1, keepdims=True)
    agg = jnp.dot(adj, h_lin, preferred_element_type=f32)
    # Zero-in-degree rows give agg == 0, so max(deg, 1) reproduces DGL's 0 output.
    h_stripe = agg / jnp.maximum(deg, 1.0)                 # exact per-row division

    # GCN_ass: edge attention + softmax over incoming edges
    e_dst = edst_s[pl.ds(row0, tr), :]                     # (tr, 1), bias folded
    a = e_dst + esrc_s[...]                                # (tr, n)
    a = jnp.where(a > 0, a, 0.01 * a)                      # leaky_relu(0.01)
    mask = adj > 0.0
    logits = jnp.where(mask, a, f32(-1e30))
    logits = logits - jnp.max(logits, axis=-1, keepdims=True)
    p = jnp.exp(logits) * adj                              # exact 0 off-edge (zero-deg safe)
    denom = jnp.sum(p, axis=-1, keepdims=True)
    alpha = p * (1.0 / jnp.maximum(denom, f32(1e-30)))     # exact (tr,1) reciprocal
    h_att = jnp.dot(alpha, h_ass, preferred_element_type=f32)   # (tr, c)

    # s = softmax(GCN_ass(...), dim=-1)
    z = h_att - jnp.max(h_att, axis=-1, keepdims=True)
    ez = jnp.exp(z)
    s_stripe = ez * (1.0 / jnp.sum(ez, axis=-1, keepdims=True))  # (tr, c)

    sall_s[pl.ds(row0, tr), :] = s_stripe

    # lane-dense per-node slab: h in lanes [0, d), s in lanes [d, d + c)
    out_ns_ref[:, 0:d] = h_stripe
    out_ns_ref[:, d:d + c] = s_stripe

    # running (C, .) poolings, expressed as contractions (no transposes)
    eacc_s[...] += lax.dot_general(s_stripe, h_stripe, (((0,), (0,)), ((), ())),
                                   preferred_element_type=f32)       # s^T h
    stadj_s[...] += lax.dot_general(s_stripe, adj, (((0,), (0,)), ((), ())),
                                    preferred_element_type=f32)      # s^T adj

    # ---- last step: cluster-level outputs -------------------------------------
    @pl.when(i == pl.num_programs(0) - 1)
    def _():
        e_pool = eacc_s[...]                                           # (c, d)
        adj_g1 = jnp.dot(stadj_s[...], sall_s[...],
                         preferred_element_type=f32)                    # (c, c)

        # MLP (eval: dropout = identity, activation = None -> identity)
        y = jnp.dot(e_pool, w1_ref[...], preferred_element_type=f32) + b1_ref[...]
        y = jnp.dot(y, w2_ref[...], preferred_element_type=f32) + b2_ref[...]

        # KNN adjacency (self included), symmetrized (A + A^T) / 2
        gram = lax.dot_general(y, y, (((1,), (1,)), ((), ())),
                               preferred_element_type=f32)              # (c, c)
        row_i = lax.broadcasted_iota(jnp.int32, (c, c), 0)
        col_i = lax.broadcasted_iota(jnp.int32, (c, c), 1)
        eye = (row_i == col_i).astype(f32)
        diag_col = jnp.sum(y * y, axis=-1, keepdims=True)               # (c, 1) direct
        diag_row = jnp.sum(gram * eye, axis=0, keepdims=True)           # (1, c), no transpose
        d2 = diag_col + diag_row - 2.0 * gram
        colf = col_i.astype(f32)
        knn = jnp.zeros((c, c), f32)
        dist = d2
        for _ in range(k):                                   # static, tiny unroll
            m = jnp.min(dist, axis=-1, keepdims=True)
            is_min = dist <= m
            # TODO(synk): ties broken on lowest column index; sklearn's ordering for
            # exactly-equal distances is unspecified, so degenerate ties may differ.
            min_col = jnp.min(jnp.where(is_min, colf, f32(c)), axis=-1, keepdims=True)
            pick = jnp.logical_and(is_min, colf == min_col).astype(f32)
            knn = knn + pick
            dist = jnp.where(pick > 0, f32(3e38), dist)
        # knn^T via an identity contraction: O(C^3) is negligible at small C and is
        # guaranteed to lower; swap for pltpu.einshape / transpose if C grows large.
        knn_t = lax.dot_general(knn, eye, (((0,), (0,)), ((), ())),
                                preferred_element_type=f32)
        adj_f1 = (knn + knn_t) * 0.5

        # lane-dense cluster slab: e | adj_g1 | adj_f1
        out_c_ref[0:c, 0:d] = e_pool
        out_c_ref[0:c, d:d + c] = adj_g1
        out_c_ref[0:c, d + c:d + 2 * c] = adj_f1


# ------------------------------- ASS forward ----------------------------------

@functools.partial(jax.jit, static_argnames=("k", "tr"))
def ass_forward(params, x, adj, *, k, tr=None):
    n, d = x.shape
    c = params["gcn_ass_w"].shape[1]

    if tr is None:
        tr = n
        for cand in (256, 128, 64, 32, 16):   # v7x-safe stripe sizes (VMEM O(tr*n))
            if n % cand == 0:
                tr = cand
                break
    assert n % tr == 0 and (tr % 16 == 0 or tr == n), \
        "tr must divide N and be a multiple of 16 (bf16 adj stripes)"
    steps = n // tr

    ns_w = _ru128(d + c)          # per-node slab: h | s
    c_w = _ru128(d + 2 * c)       # cluster slab:  e | adj_g1 | adj_f1
    c_rows = _ru8(c)

    adj_bf16 = adj.astype(jnp.bfloat16)   # 0/1 exact in bf16; halves the dominant DMA

    inputs = (x, adj_bf16,
              params["gcn_emb_w"], params["gcn_emb_b"],
              params["gcn_ass_w"], params["gcn_ass_b"],
              params["att_w_src"], params["att_w_dst"], params["att_b"],
              params["mlp_w1"], params["mlp_b1"],
              params["mlp_w2"], params["mlp_b2"])

    in_specs = [
        _full_spec(x.shape),                              # x resident, DMA'd once
        pl.BlockSpec((tr, n), lambda i: (i, 0)),          # adj stripes, double-buffered
    ] + [_full_spec(a.shape) for a in inputs[2:]]         # tiny weights, full blocks

    out_specs = (
        pl.BlockSpec((tr, ns_w), lambda i: (i, 0)),       # per-stripe node outputs
        pl.BlockSpec((c_rows, c_w), lambda i: (0, 0)),    # cluster outputs (last step)
    )
    out_shape = (
        jax.ShapeDtypeStruct((n, ns_w), jnp.float32),
        jax.ShapeDtypeStruct((c_rows, c_w), jnp.float32),
    )

    scratch_shapes = [
        pltpu.VMEM((n, d), jnp.float32),   # h_lin (all nodes)
        pltpu.VMEM((n, c), jnp.float32),   # h_ass (all nodes)
        pltpu.VMEM((n, 1), jnp.float32),   # e_dst (+ bias folded)
        pltpu.VMEM((1, n), jnp.float32),   # e_src row
        pltpu.VMEM((n, c), jnp.float32),   # s (needed for adj_g1 = (s^T adj) s)
        pltpu.VMEM((c, d), jnp.float32),   # running e = s^T h
        pltpu.VMEM((c, n), jnp.float32),   # running s^T adj
    ]

    cost = pl.CostEstimate(
        flops=int(2 * n * d * d + 2 * n * d * c          # projections
                  + 2 * n * n * d                        # adj @ h_lin
                  + 4 * n * n * c                        # alpha @ h_ass, s^T adj
                  + 2 * n * c * d + 2 * n * c * c        # e pooling, adj_g1
                  + 4 * c * d * d),                      # MLP
        transcendentals=int(n * n + n * c),
        bytes_accessed=int(n * n * 2 + n * d * 4 + (n * ns_w + c_rows * c_w) * 4),
    )

    out_ns, out_c = pl.pallas_call(
        functools.partial(ass_fused_kernel, n=n, d=d, c=c, k=k, tr=tr),
        grid_spec=pltpu.PrefetchScalarGridSpec(
            num_scalar_prefetch=0,
            grid=(steps,),
            in_specs=in_specs,
            out_specs=out_specs,
            scratch_shapes=scratch_shapes),
        out_shape=out_shape,
        # The row axis carries the (C, .) pooling accumulators, so it is a reduction
        # ("arbitrary"). TODO(synk): to use both v7x TensorCores, emit per-stripe
        # partial poolings + a tiny reduce kernel and mark this axis "parallel".
        compiler_params=pltpu.CompilerParams(
            dimension_semantics=("arbitrary",),
            vmem_limit_bytes=48 * 1024 * 1024),
        cost_estimate=cost,
    )(*inputs)

    h = out_ns[:, 0:d]
    s = out_ns[:, d:d + c]
    e = out_c[0:c, 0:d]
    adj_g1 = out_c[0:c, d:d + c]
    adj_f1 = out_c[0:c, d + c:d + 2 * c]
    return h, e, s, (adj_g1, adj_f1)


# --------------------------- pure-JAX reference -------------------------------

def ass_reference(params, x, adj, k):
    h_lin = x @ params["gcn_emb_w"] + params["gcn_emb_b"]
    deg = adj.sum(-1, keepdims=True)
    h = (adj @ h_lin) / jnp.maximum(deg, 1.0)
    h_ass = x @ params["gcn_ass_w"] + params["gcn_ass_b"]
    a = (h_ass @ params["att_w_dst"] + params["att_b"]) + (h_ass @ params["att_w_src"]).T
    a = jnp.where(a > 0, a, 0.01 * a)
    logits = jnp.where(adj > 0, a, -1e30)
    p = jnp.exp(logits - logits.max(-1, keepdims=True)) * adj
    alpha = p / jnp.maximum(p.sum(-1, keepdims=True), 1e-30)
    s = jax.nn.softmax(alpha @ h_ass, axis=-1)
    e = s.T @ h
    adj_g1 = s.T @ adj @ s
    y = (e @ params["mlp_w1"] + params["mlp_b1"]) @ params["mlp_w2"] + params["mlp_b2"]
    d2 = jnp.sum((y[:, None, :] - y[None, :, :]) ** 2, axis=-1)
    idx = jnp.argsort(d2, axis=-1)[:, :k]
    nc = y.shape[0]
    knn = jnp.zeros((nc, nc)).at[jnp.arange(nc)[:, None], idx].set(1.0)
    adj_f1 = (knn + knn.T) / 2.0
    return h, e, s, adj_g1, adj_f1


# ------------------------------ parameter init --------------------------------

def linear_params(key, fan_in, fan_out):
    kw, kb = jax.random.split(key)
    bound = 1.0 / jnp.sqrt(jnp.float32(fan_in))
    w = jax.random.uniform(kw, (fan_in, fan_out), jnp.float32, -bound, bound)
    b = jax.random.uniform(kb, (1, fan_out), jnp.float32, -bound, bound)
    return w, b


def init_params(key, embed_dim, num_cluster):
    ks = jax.random.split(key, 6)
    gcn_emb_w, gcn_emb_b = linear_params(ks[0], embed_dim, embed_dim)
    gcn_ass_w, gcn_ass_b = linear_params(ks[1], embed_dim, num_cluster)
    att_w, att_b = linear_params(ks[2], 2 * num_cluster, 1)   # Linear(2C, 1)
    att_w_src = att_w[:num_cluster, :]            # (C, 1) -> multiplies src features
    att_w_dst = att_w[num_cluster:, :]            # (C, 1) -> multiplies dst features
    mlp_w1, mlp_b1 = linear_params(ks[3], embed_dim, embed_dim)
    mlp_w2, mlp_b2 = linear_params(ks[4], embed_dim, embed_dim)
    return dict(gcn_emb_w=gcn_emb_w, gcn_emb_b=gcn_emb_b,
                gcn_ass_w=gcn_ass_w, gcn_ass_b=gcn_ass_b,
                att_w_src=att_w_src, att_w_dst=att_w_dst, att_b=att_b,
                mlp_w1=mlp_w1, mlp_b1=mlp_b1, mlp_w2=mlp_w2, mlp_b2=mlp_b2)


# ----------------------------------- main --------------------------------------

if __name__ == "__main__":
    N, EMBED_DIM, NUM_CLUSTER, K, TR = 32, 32, 8, 3, 16

    key = jax.random.PRNGKey(0)
    k_params, k_x, k_adj = jax.random.split(key, 3)

    params = init_params(k_params, EMBED_DIM, NUM_CLUSTER)
    x = jax.random.normal(k_x, (N, EMBED_DIM), jnp.float32)
    # random directed graph with guaranteed self-loops (no isolated nodes)
    adj = (jax.random.uniform(k_adj, (N, N)) < 0.25).astype(jnp.float32)
    adj = jnp.maximum(adj, jnp.eye(N, dtype=jnp.float32))

    h, e, s, (adj_g1, adj_f1) = ass_forward(params, x, adj, k=K, tr=TR)
    jax.block_until_ready((h, e, s, adj_g1, adj_f1))

    assert h.shape == (N, EMBED_DIM)
    assert e.shape == (NUM_CLUSTER, EMBED_DIM)
    assert s.shape == (N, NUM_CLUSTER)
    assert adj_g1.shape == (NUM_CLUSTER, NUM_CLUSTER)
    assert adj_f1.shape == (NUM_CLUSTER, NUM_CLUSTER)

    with jax.default_matmul_precision("float32"):
        rh, re, rs, rg, rf = ass_reference(params, x, adj, K)
    for got, ref in ((h, rh), (e, re), (s, rs), (adj_g1, rg), (adj_f1, rf)):
        assert jnp.allclose(got, ref, rtol=5e-3, atol=5e-3), \
            float(jnp.max(jnp.abs(got - ref)))

    print("KERNEL_OK")
</pallas_src>

<mosaic_0001>
module attributes {stable_mosaic.version = 11 : i64} {
  func.func @ass_fused_kernel(%arg0: i32, %arg1: memref<32x32xf32, #tpu.memory_space<vmem>>, %arg2: memref<16x32xbf16, #tpu.memory_space<vmem>>, %arg3: memref<32x32xf32, #tpu.memory_space<vmem>>, %arg4: memref<1x32xf32, #tpu.memory_space<vmem>>, %arg5: memref<32x8xf32, #tpu.memory_space<vmem>>, %arg6: memref<1x8xf32, #tpu.memory_space<vmem>>, %arg7: memref<8x1xf32, #tpu.memory_space<vmem>>, %arg8: memref<8x1xf32, #tpu.memory_space<vmem>>, %arg9: memref<1x1xf32, #tpu.memory_space<vmem>>, %arg10: memref<32x32xf32, #tpu.memory_space<vmem>>, %arg11: memref<1x32xf32, #tpu.memory_space<vmem>>, %arg12: memref<32x32xf32, #tpu.memory_space<vmem>>, %arg13: memref<1x32xf32, #tpu.memory_space<vmem>>, %arg14: memref<16x128xf32, #tpu.memory_space<vmem>>, %arg15: memref<8x128xf32, #tpu.memory_space<vmem>>, %arg16: memref<32x32xf32, #tpu.memory_space<vmem>>, %arg17: memref<32x8xf32, #tpu.memory_space<vmem>>, %arg18: memref<32x1xf32, #tpu.memory_space<vmem>>, %arg19: memref<1x32xf32, #tpu.memory_space<vmem>>, %arg20: memref<32x8xf32, #tpu.memory_space<vmem>>, %arg21: memref<8x32xf32, #tpu.memory_space<vmem>>, %arg22: memref<8x32xf32, #tpu.memory_space<vmem>>) attributes {dimension_semantics = [#tpu.dimension_semantics<arbitrary>], iteration_bounds = array<i64: 2>, scalar_prefetch = 0 : i64, scratch_operands = 7 : i64, tpu.core_type = #tpu.core_type<tc>, window_params = [{pipeline_mode = #tpu.pipeline_mode<synchronous>, transform_indices = @transform_0, window_bounds = array<i64: 32, 32>}, {transform_indices = @transform_1, window_bounds = array<i64: 16, 32>}, {pipeline_mode = #tpu.pipeline_mode<synchronous>, transform_indices = @transform_2, window_bounds = array<i64: 32, 32>}, {pipeline_mode = #tpu.pipeline_mode<synchronous>, transform_indices = @transform_3, window_bounds = array<i64: 1, 32>}, {pipeline_mode = #tpu.pipeline_mode<synchronous>, transform_indices = @transform_4, window_bounds = array<i64: 32, 8>}, {pipeline_mode = #tpu.pipeline_mode<synchronous>, transform_indices = @transform_5, window_bounds = array<i64: 1, 8>}, {pipeline_mode = #tpu.pipeline_mode<synchronous>, transform_indices = @transform_6, window_bounds = array<i64: 8, 1>}, {pipeline_mode = #tpu.pipeline_mode<synchronous>, transform_indices = @transform_7, window_bounds = array<i64: 8, 1>}, {pipeline_mode = #tpu.pipeline_mode<synchronous>, transform_indices = @transform_8, window_bounds = array<i64: 1, 1>}, {pipeline_mode = #tpu.pipeline_mode<synchronous>, transform_indices = @transform_9, window_bounds = array<i64: 32, 32>}, {pipeline_mode = #tpu.pipeline_mode<synchronous>, transform_indices = @transform_10, window_bounds = array<i64: 1, 32>}, {pipeline_mode = #tpu.pipeline_mode<synchronous>, transform_indices = @transform_11, window_bounds = array<i64: 32, 32>}, {pipeline_mode = #tpu.pipeline_mode<synchronous>, transform_indices = @transform_12, window_bounds = array<i64: 1, 32>}, {transform_indices = @transform_13, window_bounds = array<i64: 16, 128>}, {pipeline_mode = #tpu.pipeline_mode<synchronous>, transform_indices = @transform_14, window_bounds = array<i64: 8, 128>}]} {
    %c0_i32 = arith.constant 0 : i32
    %0 = arith.cmpi eq, %arg0, %c0_i32 : i32
    %1 = arith.extui %0 : i1 to i32
    %c0_i32_0 = arith.constant 0 : i32
    %2 = arith.cmpi ne, %1, %c0_i32_0 : i32
    scf.if %2 {
      %c0_38 = arith.constant 0 : index
      %c0_39 = arith.constant 0 : index
      %72 = vector.load %arg1[%c0_38, %c0_39] : memref<32x32xf32, #tpu.memory_space<vmem>>, vector<32x32xf32>
      %c0_40 = arith.constant 0 : index
      %c0_41 = arith.constant 0 : index
      %73 = vector.load %arg3[%c0_40, %c0_41] : memref<32x32xf32, #tpu.memory_space<vmem>>, vector<32x32xf32>
      %cst_42 = arith.constant dense<0.000000e+00> : vector<32x32xf32>
      %74 = tpu.matmul %72, %73, %cst_42 {dimension_numbers = #tpu.dot_dimension_numbers<[1], [0], [0], [1], [0, 0, 1, 1], [], []>} : vector<32x32xf32>, vector<32x32xf32>, vector<32x32xf32> -> vector<32x32xf32>
      %c0_43 = arith.constant 0 : index
      %c0_44 = arith.constant 0 : index
      %75 = vector.load %arg4[%c0_43, %c0_44] : memref<1x32xf32, #tpu.memory_space<vmem>>, vector<1x32xf32>
      %76 = vector.broadcast %75 : vector<1x32xf32> to vector<32x32xf32>
      %77 = arith.addf %74, %76 : vector<32x32xf32>
      %c0_45 = arith.constant 0 : index
      %c0_46 = arith.constant 0 : index
      %78 = vector.load %arg16[%c0_45, %c0_46] : memref<32x32xf32, #tpu.memory_space<vmem>>, vector<32x32xf32>
      tpu.vector_store %arg16[%c0_45, %c0_46], %77 {strides = array<i32>} : memref<32x32xf32, #tpu.memory_space<vmem>>, vector<32x32xf32>,
      %c0_47 = arith.constant 0 : index
      %c0_48 = arith.constant 0 : index
      %79 = vector.load %arg5[%c0_47, %c0_48] : memref<32x8xf32, #tpu.memory_space<vmem>>, vector<32x8xf32>
      %cst_49 = arith.constant dense<0.000000e+00> : vector<32x8xf32>
      %80 = tpu.matmul %72, %79, %cst_49 {dimension_numbers = #tpu.dot_dimension_numbers<[1], [0], [0], [1], [0, 0, 1, 1], [], []>} : vector<32x32xf32>, vector<32x8xf32>, vector<32x8xf32> -> vector<32x8xf32>
      %c0_50 = arith.constant 0 : index
      %c0_51 = arith.constant 0 : index
      %81 = vector.load %arg6[%c0_50, %c0_51] : memref<1x8xf32, #tpu.memory_space<vmem>>, vector<1x8xf32>
      %82 = vector.broadcast %81 : vector<1x8xf32> to vector<32x8xf32>
      %83 = arith.addf %80, %82 : vector<32x8xf32>
      %c0_52 = arith.constant 0 : index
      %c0_53 = arith.constant 0 : index
      %84 = vector.load %arg17[%c0_52, %c0_53] : memref<32x8xf32, #tpu.memory_space<vmem>>, vector<32x8xf32>
      tpu.vector_store %arg17[%c0_52, %c0_53], %83 {strides = array<i32>} : memref<32x8xf32, #tpu.memory_space<vmem>>, vector<32x8xf32>,
      %c0_54 = arith.constant 0 : index
      %c0_55 = arith.constant 0 : index
      %85 = vector.load %arg8[%c0_54, %c0_55] : memref<8x1xf32, #tpu.memory_space<vmem>>, vector<8x1xf32>
      %cst_56 = arith.constant dense<0.000000e+00> : vector<32x1xf32>
      %86 = tpu.matmul %83, %85, %cst_56 {dimension_numbers = #tpu.dot_dimension_numbers<[1], [0], [0], [1], [0, 0, 1, 1], [], []>} : vector<32x8xf32>, vector<8x1xf32>, vector<32x1xf32> -> vector<32x1xf32>
      %c0_57 = arith.constant 0 : index
      %c0_58 = arith.constant 0 : index
      %87 = vector.load %arg9[%c0_57, %c0_58] : memref<1x1xf32, #tpu.memory_space<vmem>>, vector<1x1xf32>
      %88 = vector.broadcast %87 : vector<1x1xf32> to vector<32x1xf32>
      %89 = arith.addf %86, %88 : vector<32x1xf32>
      %c0_59 = arith.constant 0 : index
      %c0_60 = arith.constant 0 : index
      %90 = vector.load %arg18[%c0_59, %c0_60] : memref<32x1xf32, #tpu.memory_space<vmem>>, vector<32x1xf32>
      tpu.vector_store %arg18[%c0_59, %c0_60], %89 {strides = array<i32>} : memref<32x1xf32, #tpu.memory_space<vmem>>, vector<32x1xf32>,
      %c0_61 = arith.constant 0 : index
      %c0_62 = arith.constant 0 : index
      %91 = vector.load %arg7[%c0_61, %c0_62] : memref<8x1xf32, #tpu.memory_space<vmem>>, vector<8x1xf32>
      %cst_63 = arith.constant dense<0.000000e+00> : vector<1x32xf32>
      %92 = tpu.matmul %91, %83, %cst_63 {dimension_numbers = #tpu.dot_dimension_numbers<[0], [1], [1], [0], [0, 1, 1, 0], [], []>} : vector<8x1xf32>, vector<32x8xf32>, vector<1x32xf32> -> vector<1x32xf32>
      %c0_64 = arith.constant 0 : index
      %c0_65 = arith.constant 0 : index
      %93 = vector.load %arg19[%c0_64, %c0_65] : memref<1x32xf32, #tpu.memory_space<vmem>>, vector<1x32xf32>
      tpu.vector_store %arg19[%c0_64, %c0_65], %92 {strides = array<i32>} : memref<1x32xf32, #tpu.memory_space<vmem>>, vector<1x32xf32>,
      %cst_66 = arith.constant 0.000000e+00 : f32
      %94 = vector.broadcast %cst_66 : f32 to vector<8x32xf32>
      %c0_67 = arith.constant 0 : index
      %c0_68 = arith.constant 0 : index
      %95 = vector.load %arg21[%c0_67, %c0_68] : memref<8x32xf32, #tpu.memory_space<vmem>>, vector<8x32xf32>
      tpu.vector_store %arg21[%c0_67, %c0_68], %94 {strides = array<i32>} : memref<8x32xf32, #tpu.memory_space<vmem>>, vector<8x32xf32>,
      %cst_69 = arith.constant 0.000000e+00 : f32
      %96 = vector.broadcast %cst_69 : f32 to vector<8x32xf32>
      %c0_70 = arith.constant 0 : index
      %c0_71 = arith.constant 0 : index
      %97 = vector.load %arg22[%c0_70, %c0_71] : memref<8x32xf32, #tpu.memory_space<vmem>>, vector<8x32xf32>
      tpu.vector_store %arg22[%c0_70, %c0_71], %96 {strides = array<i32>} : memref<8x32xf32, #tpu.memory_space<vmem>>, vector<8x32xf32>,
    } else {
    }
    %c0 = arith.constant 0 : index
    %c0_1 = arith.constant 0 : index
    %3 = vector.load %arg2[%c0, %c0_1] : memref<16x32xbf16, #tpu.memory_space<vmem>>, vector<16x32xbf16>
    %4 = arith.extf %3 : vector<16x32xbf16> to vector<16x32xf32>
    %c0_2 = arith.constant 0 : index
    %c0_3 = arith.constant 0 : index
    %5 = vector.load %arg16[%c0_2, %c0_3] : memref<32x32xf32, #tpu.memory_space<vmem>>, vector<32x32xf32>
    %c0_4 = arith.constant 0 : index
    %c0_5 = arith.constant 0 : index
    %6 = vector.load %arg17[%c0_4, %c0_5] : memref<32x8xf32, #tpu.memory_space<vmem>>, vector<32x8xf32>
    %c16_i32 = arith.constant 16 : i32
    %7 = arith.muli %arg0, %c16_i32 : i32
    %8 = tpu.assume_multiple %7, 16 : i32
    %cst = arith.constant dense<0.000000e+00> : vector<16xf32>
    %9 = vector.multi_reduction <add>, %4, %cst [1] : vector<16x32xf32> to vector<16xf32>
    %10 = vector.shape_cast %9 : vector<16xf32> to vector<16x1xf32>
    %cst_6 = arith.constant dense<0.000000e+00> : vector<16x32xf32>
    %11 = tpu.matmul %4, %5, %cst_6 {dimension_numbers = #tpu.dot_dimension_numbers<[1], [0], [0], [1], [0, 0, 1, 1], [], []>} : vector<16x32xf32>, vector<32x32xf32>, vector<16x32xf32> -> vector<16x32xf32>
    %cst_7 = arith.constant 1.000000e+00 : f32
    %12 = vector.broadcast %cst_7 : f32 to vector<16x1xf32>
    %13 = arith.maximumf %10, %12 : vector<16x1xf32>
    %14 = vector.broadcast %13 : vector<16x1xf32> to vector<16x32xf32>
    %15 = arith.divf %11, %14 : vector<16x32xf32>
    %16 = arith.index_cast %8 : i32 to index
    %c0_8 = arith.constant 0 : index
    %17 = vector.load %arg18[%16, %c0_8] : memref<32x1xf32, #tpu.memory_space<vmem>>, vector<16x1xf32>
    %c0_9 = arith.constant 0 : index
    %c0_10 = arith.constant 0 : index
    %18 = vector.load %arg19[%c0_9, %c0_10] : memref<1x32xf32, #tpu.memory_space<vmem>>, vector<1x32xf32>
    %19 = vector.broadcast %17 : vector<16x1xf32> to vector<16x32xf32>
    %20 = vector.broadcast %18 : vector<1x32xf32> to vector<16x32xf32>
    %21 = arith.addf %19, %20 : vector<16x32xf32>
    %cst_11 = arith.constant 0.000000e+00 : f32
    %22 = vector.broadcast %cst_11 : f32 to vector<16x32xf32>
    %23 = arith.cmpf ogt, %21, %22 : vector<16x32xf32>
    %cst_12 = arith.constant 0.00999999977 : f32
    %24 = vector.broadcast %cst_12 : f32 to vector<16x32xf32>
    %25 = arith.mulf %24, %21 : vector<16x32xf32>
    %26 = arith.select %23, %21, %25 : vector<16x32xi1>, vector<16x32xf32>
    %cst_13 = arith.constant 0.000000e+00 : f32
    %27 = vector.broadcast %cst_13 : f32 to vector<16x32xf32>
    %28 = arith.cmpf ogt, %4, %27 : vector<16x32xf32>
    %cst_14 = arith.constant -1.000000e+30 : f32
    %29 = vector.broadcast %cst_14 : f32 to vector<16x32xf32>
    %30 = arith.select %28, %26, %29 : vector<16x32xi1>, vector<16x32xf32>
    %cst_15 = arith.constant dense<0xFF800000> : vector<16xf32>
    %31 = vector.multi_reduction <maximumf>, %30, %cst_15 [1] : vector<16x32xf32> to vector<16xf32>
    %32 = vector.shape_cast %31 : vector<16xf32> to vector<16x1xf32>
    %33 = vector.broadcast %32 : vector<16x1xf32> to vector<16x32xf32>
    %34 = arith.subf %30, %33 : vector<16x32xf32>
    %35 = math.exp %34 : vector<16x32xf32>
    %36 = arith.mulf %35, %4 : vector<16x32xf32>
    %cst_16 = arith.constant dense<0.000000e+00> : vector<16xf32>
    %37 = vector.multi_reduction <add>, %36, %cst_16 [1] : vector<16x32xf32> to vector<16xf32>
    %38 = vector.shape_cast %37 : vector<16xf32> to vector<16x1xf32>
    %cst_17 = arith.constant 1.000000e-30 : f32
    %39 = vector.broadcast %cst_17 : f32 to vector<16x1xf32>
    %40 = arith.maximumf %38, %39 : vector<16x1xf32>
    %cst_18 = arith.constant 1.000000e+00 : f32
    %41 = vector.broadcast %cst_18 : f32 to vector<16x1xf32>
    %42 = arith.divf %41, %40 : vector<16x1xf32>
    %43 = vector.broadcast %42 : vector<16x1xf32> to vector<16x32xf32>
    %44 = arith.mulf %36, %43 : vector<16x32xf32>
    %cst_19 = arith.constant dense<0.000000e+00> : vector<16x8xf32>
    %45 = tpu.matmul %44, %6, %cst_19 {dimension_numbers = #tpu.dot_dimension_numbers<[1], [0], [0], [1], [0, 0, 1, 1], [], []>} : vector<16x32xf32>, vector<32x8xf32>, vector<16x8xf32> -> vector<16x8xf32>
    %cst_20 = arith.constant dense<0xFF800000> : vector<16xf32>
    %46 = vector.multi_reduction <maximumf>, %45, %cst_20 [1] : vector<16x8xf32> to vector<16xf32>
    %47 = vector.shape_cast %46 : vector<16xf32> to vector<16x1xf32>
    %48 = vector.broadcast %47 : vector<16x1xf32> to vector<16x8xf32>
    %49 = arith.subf %45, %48 : vector<16x8xf32>
    %50 = math.exp %49 : vector<16x8xf32>
    %cst_21 = arith.constant dense<0.000000e+00> : vector<16xf32>
    %51 = vector.multi_reduction <add>, %50, %cst_21 [1] : vector<16x8xf32> to vector<16xf32>
    %52 = vector.shape_cast %51 : vector<16xf32> to vector<16x1xf32>
    %cst_22 = arith.constant 1.000000e+00 : f32
    %53 = vector.broadcast %cst_22 : f32 to vector<16x1xf32>
    %54 = arith.divf %53, %52 : vector<16x1xf32>
    %55 = vector.broadcast %54 : vector<16x1xf32> to vector<16x8xf32>
    %56 = arith.mulf %50, %55 : vector<16x8xf32>
    %57 = arith.index_cast %8 : i32 to index
    %c0_23 = arith.constant 0 : index
    %58 = vector.load %arg20[%57, %c0_23] : memref<32x8xf32, #tpu.memory_space<vmem>>, vector<16x8xf32>
    tpu.vector_store %arg20[%57, %c0_23], %56 {strides = array<i32>} : memref<32x8xf32, #tpu.memory_space<vmem>>, vector<16x8xf32>,
    %c0_24 = arith.constant 0 : index
    %c0_25 = arith.constant 0 : index
    %59 = vector.load %arg14[%c0_24, %c0_25] : memref<16x128xf32, #tpu.memory_space<vmem>>, vector<16x32xf32>
    tpu.vector_store %arg14[%c0_24, %c0_25], %15 {strides = array<i32>} : memref<16x128xf32, #tpu.memory_space<vmem>>, vector<16x32xf32>,
    %c0_26 = arith.constant 0 : index
    %c32 = arith.constant 32 : index
    %60 = vector.load %arg14[%c0_26, %c32] : memref<16x128xf32, #tpu.memory_space<vmem>>, vector<16x8xf32>
    tpu.vector_store %arg14[%c0_26, %c32], %56 {strides = array<i32>} : memref<16x128xf32, #tpu.memory_space<vmem>>, vector<16x8xf32>,
    %c0_27 = arith.constant 0 : index
    %c0_28 = arith.constant 0 : index
    %61 = vector.load %arg21[%c0_27, %c0_28] : memref<8x32xf32, #tpu.memory_space<vmem>>, vector<8x32xf32>
    %cst_29 = arith.constant dense<0.000000e+00> : vector<8x32xf32>
    %62 = tpu.matmul %56, %15, %cst_29 {dimension_numbers = #tpu.dot_dimension_numbers<[0], [0], [1], [1], [0, 1, 1, 1], [], []>} : vector<16x8xf32>, vector<16x32xf32>, vector<8x32xf32> -> vector<8x32xf32>
    %63 = arith.addf %61, %62 : vector<8x32xf32>
    %c0_30 = arith.constant 0 : index
    %c0_31 = arith.constant 0 : index
    %64 = vector.load %arg21[%c0_30, %c0_31] : memref<8x32xf32, #tpu.memory_space<vmem>>, vector<8x32xf32>
    tpu.vector_store %arg21[%c0_30, %c0_31], %63 {strides = array<i32>} : memref<8x32xf32, #tpu.memory_space<vmem>>, vector<8x32xf32>,
    %c0_32 = arith.constant 0 : index
    %c0_33 = arith.constant 0 : index
    %65 = vector.load %arg22[%c0_32, %c0_33] : memref<8x32xf32, #tpu.memory_space<vmem>>, vector<8x32xf32>
    %cst_34 = arith.constant dense<0.000000e+00> : vector<8x32xf32>
    %66 = tpu.matmul %56, %4, %cst_34 {dimension_numbers = #tpu.dot_dimension_numbers<[0], [0], [1], [1], [0, 1, 1, 1], [], []>} : vector<16x8xf32>, vector<16x32xf32>, vector<8x32xf32> -> vector<8x32xf32>
    %67 = arith.addf %65, %66 : vector<8x32xf32>
    %c0_35 = arith.constant 0 : index
    %c0_36 = arith.constant 0 : index
    %68 = vector.load %arg22[%c0_35, %c0_36] : memref<8x32xf32, #tpu.memory_space<vmem>>, vector<8x32xf32>
    tpu.vector_store %arg22[%c0_35, %c0_36], %67 {strides = array<i32>} : memref<8x32xf32, #tpu.memory_space<vmem>>, vector<8x32xf32>,
    %c1_i32 = arith.constant 1 : i32
    %69 = arith.cmpi eq, %arg0, %c1_i32 : i32
    %70 = arith.extui %69 : i1 to i32
    %c0_i32_37 = arith.constant 0 : i32
    %71 = arith.cmpi ne, %70, %c0_i32_37 : i32
    scf.if %71 {
      %c0_38 = arith.constant 0 : index
      %c0_39 = arith.constant 0 : index
      %72 = vector.load %arg21[%c0_38, %c0_39] : memref<8x32xf32, #tpu.memory_space<vmem>>, vector<8x32xf32>
      %c0_40 = arith.constant 0 : index
      %c0_41 = arith.constant 0 : index
      %73 = vector.load %arg22[%c0_40, %c0_41] : memref<8x32xf32, #tpu.memory_space<vmem>>, vector<8x32xf32>
      %c0_42 = arith.constant 0 : index
      %c0_43 = arith.constant 0 : index
      %74 = vector.load %arg20[%c0_42, %c0_43] : memref<32x8xf32, #tpu.memory_space<vmem>>, vector<32x8xf32>
      %cst_44 = arith.constant dense<0.000000e+00> : vector<8x8xf32>
      %75 = tpu.matmul %73, %74, %cst_44 {dimension_numbers = #tpu.dot_dimension_numbers<[1], [0], [0], [1], [0, 0, 1, 1], [], []>} : vector<8x32xf32>, vector<32x8xf32>, vector<8x8xf32> -> vector<8x8xf32>
      %c0_45 = arith.constant 0 : index
      %c0_46 = arith.constant 0 : index
      %76 = vector.load %arg10[%c0_45, %c0_46] : memref<32x32xf32, #tpu.memory_space<vmem>>, vector<32x32xf32>
      %cst_47 = arith.constant dense<0.000000e+00> : vector<8x32xf32>
      %77 = tpu.matmul %72, %76, %cst_47 {dimension_numbers = #tpu.dot_dimension_numbers<[1], [0], [0], [1], [0, 0, 1, 1], [], []>} : vector<8x32xf32>, vector<32x32xf32>, vector<8x32xf32> -> vector<8x32xf32>
      %c0_48 = arith.constant 0 : index
      %c0_49 = arith.constant 0 : index
      %78 = vector.load %arg11[%c0_48, %c0_49] : memref<1x32xf32, #tpu.memory_space<vmem>>, vector<1x32xf32>
      %79 = vector.broadcast %78 : vector<1x32xf32> to vector<8x32xf32>
      %80 = arith.addf %77, %79 : vector<8x32xf32>
      %c0_50 = arith.constant 0 : index
      %c0_51 = arith.constant 0 : index
      %81 = vector.load %arg12[%c0_50, %c0_51] : memref<32x32xf32, #tpu.memory_space<vmem>>, vector<32x32xf32>
      %cst_52 = arith.constant dense<0.000000e+00> : vector<8x32xf32>
      %82 = tpu.matmul %80, %81, %cst_52 {dimension_numbers = #tpu.dot_dimension_numbers<[1], [0], [0], [1], [0, 0, 1, 1], [], []>} : vector<8x32xf32>, vector<32x32xf32>, vector<8x32xf32> -> vector<8x32xf32>
      %c0_53 = arith.constant 0 : index
      %c0_54 = arith.constant 0 : index
      %83 = vector.load %arg13[%c0_53, %c0_54] : memref<1x32xf32, #tpu.memory_space<vmem>>, vector<1x32xf32>
      %84 = vector.broadcast %83 : vector<1x32xf32> to vector<8x32xf32>
      %85 = arith.addf %82, %84 : vector<8x32xf32>
      %cst_55 = arith.constant dense<0.000000e+00> : vector<8x8xf32>
      %86 = tpu.matmul %85, %85, %cst_55 {dimension_numbers = #tpu.dot_dimension_numbers<[1], [1], [0], [0], [0, 0, 1, 0], [], []>} : vector<8x32xf32>, vector<8x32xf32>, vector<8x8xf32> -> vector<8x8xf32>
      %87 = tpu.iota {dimensions = array<i32: 0>} : vector<8x8xi32>
      %88 = tpu.iota {dimensions = array<i32: 1>} : vector<8x8xi32>
      %89 = arith.cmpi eq, %87, %88 : vector<8x8xi32>
      %90 = arith.extui %89 : vector<8x8xi1> to vector<8x8xi32>
      %91 = arith.sitofp %90 : vector<8x8xi32> to vector<8x8xf32>
      %92 = arith.mulf %85, %85 : vector<8x32xf32>
      %cst_56 = arith.constant dense<0.000000e+00> : vector<8xf32>
      %93 = vector.multi_reduction <add>, %92, %cst_56 [1] : vector<8x32xf32> to vector<8xf32>
      %94 = vector.shape_cast %93 : vector<8xf32> to vector<8x1xf32>
      %95 = arith.mulf %86, %91 : vector<8x8xf32>
      %cst_57 = arith.constant dense<0.000000e+00> : vector<8xf32>
      %96 = vector.multi_reduction <add>, %95, %cst_57 [0] : vector<8x8xf32> to vector<8xf32>
      %97 = vector.shape_cast %96 : vector<8xf32> to vector<1x8xf32>
      %98 = vector.broadcast %94 : vector<8x1xf32> to vector<8x8xf32>
      %99 = vector.broadcast %97 : vector<1x8xf32> to vector<8x8xf32>
      %100 = arith.addf %98, %99 : vector<8x8xf32>
      %cst_58 = arith.constant 2.000000e+00 : f32
      %101 = vector.broadcast %cst_58 : f32 to vector<8x8xf32>
      %102 = arith.mulf %101, %86 : vector<8x8xf32>
      %103 = arith.subf %100, %102 : vector<8x8xf32>
      %104 = arith.sitofp %88 : vector<8x8xi32> to vector<8x8xf32>
      %cst_59 = arith.constant 0.000000e+00 : f32
      %105 = vector.broadcast %cst_59 : f32 to vector<8x8xf32>
      %cst_60 = arith.constant dense<0x7F800000> : vector<8xf32>
      %106 = vector.multi_reduction <minimumf>, %103, %cst_60 [1] : vector<8x8xf32> to vector<8xf32>
      %107 = vector.shape_cast %106 : vector<8xf32> to vector<8x1xf32>
      %108 = vector.broadcast %107 : vector<8x1xf32> to vector<8x8xf32>
      %109 = arith.cmpf ole, %103, %108 : vector<8x8xf32>
      %cst_61 = arith.constant 8.000000e+00 : f32
      %110 = vector.broadcast %cst_61 : f32 to vector<8x8xf32>
      %111 = arith.select %109, %104, %110 : vector<8x8xi1>, vector<8x8xf32>
      %cst_62 = arith.constant dense<0x7F800000> : vector<8xf32>
      %112 = vector.multi_reduction <minimumf>, %111, %cst_62 [1] : vector<8x8xf32> to vector<8xf32>
      %113 = vector.shape_cast %112 : vector<8xf32> to vector<8x1xf32>
      %114 = vector.broadcast %113 : vector<8x1xf32> to vector<8x8xf32>
      %115 = arith.cmpf oeq, %104, %114 : vector<8x8xf32>
      %116 = arith.andi %109, %115 : vector<8x8xi1>
      %117 = arith.extui %116 : vector<8x8xi1> to vector<8x8xi32>
      %118 = arith.sitofp %117 : vector<8x8xi32> to vector<8x8xf32>
      %119 = arith.addf %105, %118 : vector<8x8xf32>
      %cst_63 = arith.constant 0.000000e+00 : f32
      %120 = vector.broadcast %cst_63 : f32 to vector<8x8xf32>
      %121 = arith.cmpf ogt, %118, %120 : vector<8x8xf32>
      %cst_64 = arith.constant 3.000000e+38 : f32
      %122 = vector.broadcast %cst_64 : f32 to vector<8x8xf32>
      %123 = arith.select %121, %122, %103 : vector<8x8xi1>, vector<8x8xf32>
      %cst_65 = arith.constant dense<0x7F800000> : vector<8xf32>
      %124 = vector.multi_reduction <minimumf>, %123, %cst_65 [1] : vector<8x8xf32> to vector<8xf32>
      %125 = vector.shape_cast %124 : vector<8xf32> to vector<8x1xf32>
      %126 = vector.broadcast %125 : vector<8x1xf32> to vector<8x8xf32>
      %127 = arith.cmpf ole, %123, %126 : vector<8x8xf32>
      %cst_66 = arith.constant 8.000000e+00 : f32
      %128 = vector.broadcast %cst_66 : f32 to vector<8x8xf32>
      %129 = arith.select %127, %104, %128 : vector<8x8xi1>, vector<8x8xf32>
      %cst_67 = arith.constant dense<0x7F800000> : vector<8xf32>
      %130 = vector.multi_reduction <minimumf>, %129, %cst_67 [1] : vector<8x8xf32> to vector<8xf32>
      %131 = vector.shape_cast %130 : vector<8xf32> to vector<8x1xf32>
      %132 = vector.broadcast %131 : vector<8x1xf32> to vector<8x8xf32>
      %133 = arith.cmpf oeq, %104, %132 : vector<8x8xf32>
      %134 = arith.andi %127, %133 : vector<8x8xi1>
      %135 = arith.extui %134 : vector<8x8xi1> to vector<8x8xi32>
      %136 = arith.sitofp %135 : vector<8x8xi32> to vector<8x8xf32>
      %137 = arith.addf %119, %136 : vector<8x8xf32>
      %cst_68 = arith.constant 0.000000e+00 : f32
      %138 = vector.broadcast %cst_68 : f32 to vector<8x8xf32>
      %139 = arith.cmpf ogt, %136, %138 : vector<8x8xf32>
      %cst_69 = arith.constant 3.000000e+38 : f32
      %140 = vector.broadcast %cst_69 : f32 to vector<8x8xf32>
      %141 = arith.select %139, %140, %123 : vector<8x8xi1>, vector<8x8xf32>
      %cst_70 = arith.constant dense<0x7F800000> : vector<8xf32>
      %142 = vector.multi_reduction <minimumf>, %141, %cst_70 [1] : vector<8x8xf32> to vector<8xf32>
      %143 = vector.shape_cast %142 : vector<8xf32> to vector<8x1xf32>
      %144 = vector.broadcast %143 : vector<8x1xf32> to vector<8x8xf32>
      %145 = arith.cmpf ole, %141, %144 : vector<8x8xf32>
      %cst_71 = arith.constant 8.000000e+00 : f32
      %146 = vector.broadcast %cst_71 : f32 to vector<8x8xf32>
      %147 = arith.select %145, %104, %146 : vector<8x8xi1>, vector<8x8xf32>
      %cst_72 = arith.constant dense<0x7F800000> : vector<8xf32>
      %148 = vector.multi_reduction <minimumf>, %147, %cst_72 [1] : vector<8x8xf32> to vector<8xf32>
      %149 = vector.shape_cast %148 : vector<8xf32> to vector<8x1xf32>
      %150 = vector.broadcast %149 : vector<8x1xf32> to vector<8x8xf32>
      %151 = arith.cmpf oeq, %104, %150 : vector<8x8xf32>
      %152 = arith.andi %145, %151 : vector<8x8xi1>
      %153 = arith.extui %152 : vector<8x8xi1> to vector<8x8xi32>
      %154 = arith.sitofp %153 : vector<8x8xi32> to vector<8x8xf32>
      %155 = arith.addf %137, %154 : vector<8x8xf32>
      %cst_73 = arith.constant dense<0.000000e+00> : vector<8x8xf32>
      %156 = tpu.matmul %155, %91, %cst_73 {dimension_numbers = #tpu.dot_dimension_numbers<[0], [0], [1], [1], [0, 1, 1, 1], [], []>} : vector<8x8xf32>, vector<8x8xf32>, vector<8x8xf32> -> vector<8x8xf32>
      %157 = arith.addf %155, %156 : vector<8x8xf32>
      %cst_74 = arith.constant 5.000000e-01 : f32
      %158 = vector.broadcast %cst_74 : f32 to vector<8x8xf32>
      %159 = arith.mulf %157, %158 : vector<8x8xf32>
      %c0_75 = arith.constant 0 : index
      %c0_76 = arith.constant 0 : index
      %160 = vector.load %arg15[%c0_75, %c0_76] : memref<8x128xf32, #tpu.memory_space<vmem>>, vector<8x32xf32>
      tpu.vector_store %arg15[%c0_75, %c0_76], %72 {strides = array<i32>} : memref<8x128xf32, #tpu.memory_space<vmem>>, vector<8x32xf32>,
      %c0_77 = arith.constant 0 : index
      %c32_78 = arith.constant 32 : index
      %161 = vector.load %arg15[%c0_77, %c32_78] : memref<8x128xf32, #tpu.memory_space<vmem>>, vector<8x8xf32>
      tpu.vector_store %arg15[%c0_77, %c32_78], %75 {strides = array<i32>} : memref<8x128xf32, #tpu.memory_space<vmem>>, vector<8x8xf32>,
      %c0_79 = arith.constant 0 : index
      %c40 = arith.constant 40 : index
      %162 = vector.load %arg15[%c0_79, %c40] : memref<8x128xf32, #tpu.memory_space<vmem>>, vector<8x8xf32>
      tpu.vector_store %arg15[%c0_79, %c40], %159 {strides = array<i32>} : memref<8x128xf32, #tpu.memory_space<vmem>>, vector<8x8xf32>,
    } else {
    }
    return
  }
  func.func @transform_0(%arg0: i32) -> (i32, i32) {
    %c0_i32 = arith.constant 0 : i32
    %c0_i32_0 = arith.constant 0 : i32
    %c0_i32_1 = arith.constant 0 : i32
    return %c0_i32, %c0_i32_0 : i32, i32
  }
  func.func @transform_1(%arg0: i32) -> (i32, i32) {
    %c0_i32 = arith.constant 0 : i32
    %c0_i32_0 = arith.constant 0 : i32
    return %arg0, %c0_i32 : i32, i32
  }
  func.func @transform_2(%arg0: i32) -> (i32, i32) {
    %c0_i32 = arith.constant 0 : i32
    %c0_i32_0 = arith.constant 0 : i32
    %c0_i32_1 = arith.constant 0 : i32
    return %c0_i32, %c0_i32_0 : i32, i32
  }
  func.func @transform_3(%arg0: i32) -> (i32, i32) {
    %c0_i32 = arith.constant 0 : i32
    %c0_i32_0 = arith.constant 0 : i32
    %c0_i32_1 = arith.constant 0 : i32
    return %c0_i32, %c0_i32_0 : i32, i32
  }
  func.func @transform_4(%arg0: i32) -> (i32, i32) {
    %c0_i32 = arith.constant 0 : i32
    %c0_i32_0 = arith.constant 0 : i32
    %c0_i32_1 = arith.constant 0 : i32
    return %c0_i32, %c0_i32_0 : i32, i32
  }
  func.func @transform_5(%arg0: i32) -> (i32, i32) {
    %c0_i32 = arith.constant 0 : i32
    %c0_i32_0 = arith.constant 0 : i32
    %c0_i32_1 = arith.constant 0 : i32
    return %c0_i32, %c0_i32_0 : i32, i32
  }
  func.func @transform_6(%arg0: i32) -> (i32, i32) {
    %c0_i32 = arith.constant 0 : i32
    %c0_i32_0 = arith.constant 0 : i32
    %c0_i32_1 = arith.constant 0 : i32
    return %c0_i32, %c0_i32_0 : i32, i32
  }
  func.func @transform_7(%arg0: i32) -> (i32, i32) {
    %c0_i32 = arith.constant 0 : i32
    %c0_i32_0 = arith.constant 0 : i32
    %c0_i32_1 = arith.constant 0 : i32
    return %c0_i32, %c0_i32_0 : i32, i32
  }
  func.func @transform_8(%arg0: i32) -> (i32, i32) {
    %c0_i32 = arith.constant 0 : i32
    %c0_i32_0 = arith.constant 0 : i32
    %c0_i32_1 = arith.constant 0 : i32
    return %c0_i32, %c0_i32_0 : i32, i32
  }
  func.func @transform_9(%arg0: i32) -> (i32, i32) {
    %c0_i32 = arith.constant 0 : i32
    %c0_i32_0 = arith.constant 0 : i32
    %c0_i32_1 = arith.constant 0 : i32
    return %c0_i32, %c0_i32_0 : i32, i32
  }
  func.func @transform_10(%arg0: i32) -> (i32, i32) {
    %c0_i32 = arith.constant 0 : i32
    %c0_i32_0 = arith.constant 0 : i32
    %c0_i32_1 = arith.constant 0 : i32
    return %c0_i32, %c0_i32_0 : i32, i32
  }
  func.func @transform_11(%arg0: i32) -> (i32, i32) {
    %c0_i32 = arith.constant 0 : i32
    %c0_i32_0 = arith.constant 0 : i32
    %c0_i32_1 = arith.constant 0 : i32
    return %c0_i32, %c0_i32_0 : i32, i32
  }
  func.func @transform_12(%arg0: i32) -> (i32, i32) {
    %c0_i32 = arith.constant 0 : i32
    %c0_i32_0 = arith.constant 0 : i32
    %c0_i32_1 = arith.constant 0 : i32
    return %c0_i32, %c0_i32_0 : i32, i32
  }
  func.func @transform_13(%arg0: i32) -> (i32, i32) {
    %c0_i32 = arith.constant 0 : i32
    %c0_i32_0 = arith.constant 0 : i32
    return %arg0, %c0_i32 : i32, i32
  }
  func.func @transform_14(%arg0: i32) -> (i32, i32) {
    %c0_i32 = arith.constant 0 : i32
    %c0_i32_0 = arith.constant 0 : i32
    %c0_i32_1 = arith.constant 0 : i32
    return %c0_i32, %c0_i32_0 : i32, i32
  }
}

</mosaic_0001>

<llo_original>
// kernel: ass_forward.1
$region0: #{ass_forward.1}
  #allocation0 [shape = 'u32[]', space=smem, size = 0x4, offset = 0x4, fixed_abs, tag = 'smem constant byte address 0x4 - core index']
  #allocation1 [shape = 'u32[144,128]{1,0:T(1,128)}', space=vmem, size = 0x12000, scoped, tag = 'internal scratch']
  #allocation2 [shape = 'f32[32,32]{1,0:T(8,128)}', space=vmem, size = 0x4000, scoped, tag = 'scratch operand']
  #allocation3 [shape = 'f32[32,8]{1,0:T(8,128)}', space=vmem, size = 0x4000, scoped, tag = 'scratch operand']
  #allocation4 [shape = 'f32[32,1]{1,0:T(8,128)}', space=vmem, size = 0x4000, scoped, tag = 'scratch operand']
  #allocation5 [shape = 'f32[1,32]{1,0:T(1,128)}', space=vmem, size = 0x200, scoped, tag = 'scratch operand']
  #allocation6 [shape = 'f32[32,8]{1,0:T(8,128)}', space=vmem, size = 0x4000, scoped, tag = 'scratch operand']
  #allocation7 [shape = 'f32[8,32]{1,0:T(8,128)}', space=vmem, size = 0x1000, scoped, tag = 'scratch operand']
  #allocation8 [shape = 'f32[8,32]{1,0:T(8,128)}', space=vmem, size = 0x1000, scoped, tag = 'scratch operand']
  #allocation9 [shape = 'f32[1,1]{1,0:T(1,128)S(1)}', space=vmem, size = 0x200, scoped, tag = 'scoped memory for ass_forward.1']
  %s0 = inlined_call_operand.vmem [shape: f32[32,32], index: 0, kind: input, shape index: {}]
  %s1 = inlined_call_operand.vmem [shape: bf16[32,32], index: 1, kind: input, shape index: {}]
  %s2 = inlined_call_operand.vmem [shape: f32[32,32], index: 2, kind: input, shape index: {}]
  %s3 = inlined_call_operand.hbm [shape: f32[1,32], index: 3, kind: input, shape index: {}]
  %s4 = inlined_call_operand.vmem [shape: f32[32,8], index: 4, kind: input, shape index: {}]
  %s5 = inlined_call_operand.hbm [shape: f32[1,8], index: 5, kind: input, shape index: {}]
  %s6 = inlined_call_operand.vmem [shape: f32[8,1], index: 6, kind: input, shape index: {}]
  %s7 = inlined_call_operand.vmem [shape: f32[8,1], index: 7, kind: input, shape index: {}]
  %s8 = inlined_call_operand.<no memory space> [shape: f32[1,1], index: 8, kind: input, shape index: {}]
  %s9 = inlined_call_operand.vmem [shape: f32[32,32], index: 9, kind: input, shape index: {}]
  %s10 = inlined_call_operand.vmem [shape: f32[1,32], index: 10, kind: input, shape index: {}]
  %s11 = inlined_call_operand.vmem [shape: f32[32,32], index: 11, kind: input, shape index: {}]
  %s12 = inlined_call_operand.vmem [shape: f32[1,32], index: 12, kind: input, shape index: {}]
  %s13 = inlined_call_operand.vmem [shape: f32[32,128], index: 13, kind: output, shape index: {0}]
  %s14 = inlined_call_operand.vmem [shape: f32[8,128], index: 14, kind: output, shape index: {1}]
  %15 = xla_tuple %s13, %s14
  %s16 = sld [smem:[#allocation0]]
  $region109: #{ass_forward.1} parent=0
    _
  %s18 = ssub.s32 1, %s16
  %s19 = scalar_select 0, %s18, %s16
  %v20 = vstv %s8
  %21 = vst [vmem:[#allocation9] sm:$0x1] %v20
  $region1: #{ass_forward.1} parent=0
    #allocation10 [shape = 'u8[512]{0}', space=vmem, size = 0x400, scoped, tag = 'input window, operand 3, single buffered']
    #allocation11 [shape = 's32[2]{0}', space=sflag, size = 0x8, scoped, tag = 'scoped memory for ass_forward.1']
    #allocation12 [shape = 'u8[512]{0}', space=vmem, size = 0x400, scoped, tag = 'input window, operand 5, single buffered']
    #allocation13 [shape = 's32[1]{0}', space=sflag, size = 0x4, scoped, tag = 'scoped memory for ass_forward.1']
    %22 = vsyncpa [#allocation11], 0
    %23 = vsyncpa [#allocation13], 0
    loop: start=0, step=1, limit=4
    $region2: #{ass_forward.1} parent=1 // loop_pre_header
      _
    $region3: #{ass_forward.1} parent=1 // loop_header
      %s25 = sphi 0, %s29
      %p26 = scmp.ge.s32.totalorder %s25, 4
      %s33 = sphi 0, %s33
      %s35 = sphi 0, %s33
      %s36 = sphi 0, %s35
      %s50 = sphi 0, %s36
      %s56 = sphi 0, %s58
      %s59 = sphi 0, %s56
      %s60 = sphi 0, %s59
      %s76 = sphi 0, %s60
      %s80 = sphi 0, %s80
      %s82 = sphi 0, %s80
      %s83 = sphi 0, %s82
      %s97 = sphi 0, %s83
      %s101 = sphi 0, %s101
      %s103 = sphi 0, %s101
      %s104 = sphi 0, %s103
      %s118 = sphi 0, %s104
      %s122 = sphi 0, %s122
      %s124 = sphi 0, %s122
      %s125 = sphi 0, %s124
      %s139 = sphi 0, %s125
      %s143 = sphi 0, %s143
      %s145 = sphi 0, %s143
      %s146 = sphi 0, %s145
      %s160 = sphi 0, %s146
      %s164 = sphi 0, %s164
      %s166 = sphi 0, %s164
      %s167 = sphi 0, %s166
      %s181 = sphi 0, %s167
      %s185 = sphi 0, %s185
      %s187 = sphi 0, %s185
      %s188 = sphi 0, %s187
      %s202 = sphi 0, %s188
      %s206 = sphi 0, %s206
      %s208 = sphi 0, %s206
      %s209 = sphi 0, %s208
      %s223 = sphi 0, %s209
      %s227 = sphi 0, %s227
      %s229 = sphi 0, %s227
      %s230 = sphi 0, %s229
      %s244 = sphi 0, %s230
      %s248 = sphi 0, %s248
      %s250 = sphi 0, %s248
      %s251 = sphi 0, %s250
      %s265 = sphi 0, %s251
      %s269 = sphi 0, %s269
      %s271 = sphi 0, %s269
      %s272 = sphi 0, %s271
      %s286 = sphi 0, %s272
      %s290 = sphi 0, %s290
      %s292 = sphi 0, %s290
      %s293 = sphi 0, %s292
      %s307 = sphi 0, %s293
      %s313 = sphi 0, %s315
      %s316 = sphi 0, %s313
      %s317 = sphi 0, %s316
      %s333 = sphi 0, %s317
      %s337 = sphi 0, %s337
      %s339 = sphi 0, %s337
      %s340 = sphi 0, %s339
      %s354 = sphi 0, %s340
    $region4: #{ass_forward.1} parent=1 // loop_header_branch
      %28 = sbr.rel (%p26) target = $region8
    $region5: #{ass_forward.1} parent=1 // loop_body
      %s30 = ssub.s32 %s25, 1
      %s31 = ssub.s32 %s25, 2
      %s32 = sadd.s32 %s25, 1
      %s34 = sadd.s32 %s33, 1
      %p37 = scmp.eq.s32.totalorder %s25, 1
      %p38 = scmp.ne.s32.totalorder %s33, %s35
      %p39 = scmp.eq.s32.totalorder %s25, 0
      %p40 = por %p38, %p39
      %p41 = scmp.ne.s32.totalorder %s33, %s35
      %p42 = scmp.eq.s32.totalorder %s30, 1
      %p43 = por %p41, %p42
      %p44 = scmp.ne.s32.totalorder %s35, %s36
      %p45 = scmp.eq.s32.totalorder %s30, 0
      %p46 = por %p44, %p45
      %p47 = scmp.ne.s32.totalorder %s35, %s36
      %p48 = scmp.eq.s32.totalorder %s31, 1
      %p49 = por %p47, %p48
      %p51 = scmp.ne.s32.totalorder %s36, %s50
      %p52 = scmp.eq.s32.totalorder %s31, 0
      %p53 = por %p51, %p52
      %s54 = ssub.s32 %s25, %s32
      %p55 = scmp.eq.s32.totalorder %s54, 0
      %s57 = sadd.s32 %s56, 1
      %s58 = scalar_select %p55, %s56, %s57
      %p61 = pneg %p55
      %p62 = scmp.eq.s32.totalorder %s25, 1
      %p63 = por %p61, %p62
      %p64 = scmp.ne.s32.totalorder %s56, %s59
      %p65 = scmp.eq.s32.totalorder %s25, 0
      %p66 = por %p64, %p65
      %p67 = scmp.ne.s32.totalorder %s56, %s59
      %p68 = scmp.eq.s32.totalorder %s30, 1
      %p69 = por %p67, %p68
      %p70 = scmp.ne.s32.totalorder %s59, %s60
      %p71 = scmp.eq.s32.totalorder %s30, 0
      %p72 = por %p70, %p71
      %p73 = scmp.ne.s32.totalorder %s59, %s60
      %p74 = scmp.eq.s32.totalorder %s31, 1
      %p75 = por %p73, %p74
      %p77 = scmp.ne.s32.totalorder %s60, %s76
      %p78 = scmp.eq.s32.totalorder %s31, 0
      %p79 = por %p77, %p78
      %s81 = sadd.s32 %s80, 1
      %p84 = scmp.eq.s32.totalorder %s25, 1
      %p85 = scmp.ne.s32.totalorder %s80, %s82
      %p86 = scmp.eq.s32.totalorder %s25, 0
      %p87 = por %p85, %p86
      %p88 = scmp.ne.s32.totalorder %s80, %s82
      %p89 = scmp.eq.s32.totalorder %s30, 1
      %p90 = por %p88, %p89
      %p91 = scmp.ne.s32.totalorder %s82, %s83
      %p92 = scmp.eq.s32.totalorder %s30, 0
      %p93 = por %p91, %p92
      %p94 = scmp.ne.s32.totalorder %s82, %s83
      %p95 = scmp.eq.s32.totalorder %s31, 1
      %p96 = por %p94, %p95
      %p98 = scmp.ne.s32.totalorder %s83, %s97
      %p99 = scmp.eq.s32.totalorder %s31, 0
      %p100 = por %p98, %p99
      %s102 = sadd.s32 %s101, 1
      %p105 = scmp.eq.s32.totalorder %s25, 1
      %p106 = scmp.ne.s32.totalorder %s101, %s103
      %p107 = scmp.eq.s32.totalorder %s25, 0
      %p108 = por %p106, %p107
      %p109 = scmp.ne.s32.totalorder %s101, %s103
      %p110 = scmp.eq.s32.totalorder %s30, 1
      %p111 = por %p109, %p110
      %p112 = scmp.ne.s32.totalorder %s103, %s104
      %p113 = scmp.eq.s32.totalorder %s30, 0
      %p114 = por %p112, %p113
      %p115 = scmp.ne.s32.totalorder %s103, %s104
      %p116 = scmp.eq.s32.totalorder %s31, 1
      %p117 = por %p115, %p116
      %p119 = scmp.ne.s32.totalorder %s104, %s118
      %p120 = scmp.eq.s32.totalorder %s31, 0
      %p121 = por %p119, %p120
      %s123 = sadd.s32 %s122, 1
      %p126 = scmp.eq.s32.totalorder %s25, 1
      %p127 = scmp.ne.s32.totalorder %s122, %s124
      %p128 = scmp.eq.s32.totalorder %s25, 0
      %p129 = por %p127, %p128
      %p130 = scmp.ne.s32.totalorder %s122, %s124
      %p131 = scmp.eq.s32.totalorder %s30, 1
      %p132 = por %p130, %p131
      %p133 = scmp.ne.s32.totalorder %s124, %s125
      %p134 = scmp.eq.s32.totalorder %s30, 0
      %p135 = por %p133, %p134
      %p136 = scmp.ne.s32.totalorder %s124, %s125
      %p137 = scmp.eq.s32.totalorder %s31, 1
      %p138 = por %p136, %p137
      %p140 = scmp.ne.s32.totalorder %s125, %s139
      %p141 = scmp.eq.s32.totalorder %s31, 0
      %p142 = por %p140, %p141
      %s144 = sadd.s32 %s143, 1
      %p147 = scmp.eq.s32.totalorder %s25, 1
      %p148 = scmp.ne.s32.totalorder %s143, %s145
      %p149 = scmp.eq.s32.totalorder %s25, 0
      %p150 = por %p148, %p149
      %p151 = scmp.ne.s32.totalorder %s143, %s145
      %p152 = scmp.eq.s32.totalorder %s30, 1
      %p153 = por %p151, %p152
      %p154 = scmp.ne.s32.totalorder %s145, %s146
      %p155 = scmp.eq.s32.totalorder %s30, 0
      %p156 = por %p154, %p155
      %p157 = scmp.ne.s32.totalorder %s145, %s146
      %p158 = scmp.eq.s32.totalorder %s31, 1
      %p159 = por %p157, %p158
      %p161 = scmp.ne.s32.totalorder %s146, %s160
      %p162 = scmp.eq.s32.totalorder %s31, 0
      %p163 = por %p161, %p162
      %s165 = sadd.s32 %s164, 1
      %p168 = scmp.eq.s32.totalorder %s25, 1
      %p169 = scmp.ne.s32.totalorder %s164, %s166
      %p170 = scmp.eq.s32.totalorder %s25, 0
      %p171 = por %p169, %p170
      %p172 = scmp.ne.s32.totalorder %s164, %s166
      %p173 = scmp.eq.s32.totalorder %s30, 1
      %p174 = por %p172, %p173
      %p175 = scmp.ne.s32.totalorder %s166, %s167
      %p176 = scmp.eq.s32.totalorder %s30, 0
      %p177 = por %p175, %p176
      %p178 = scmp.ne.s32.totalorder %s166, %s167
      %p179 = scmp.eq.s32.totalorder %s31, 1
      %p180 = por %p178, %p179
      %p182 = scmp.ne.s32.totalorder %s167, %s181
      %p183 = scmp.eq.s32.totalorder %s31, 0
      %p184 = por %p182, %p183
      %s186 = sadd.s32 %s185, 1
      %p189 = scmp.eq.s32.totalorder %s25, 1
      %p190 = scmp.ne.s32.totalorder %s185, %s187
      %p191 = scmp.eq.s32.totalorder %s25, 0
      %p192 = por %p190, %p191
      %p193 = scmp.ne.s32.totalorder %s185, %s187
      %p194 = scmp.eq.s32.totalorder %s30, 1
      %p195 = por %p193, %p194
      %p196 = scmp.ne.s32.totalorder %s187, %s188
      %p197 = scmp.eq.s32.totalorder %s30, 0
      %p198 = por %p196, %p197
      %p199 = scmp.ne.s32.totalorder %s187, %s188
      %p200 = scmp.eq.s32.totalorder %s31, 1
      %p201 = por %p199, %p200
      %p203 = scmp.ne.s32.totalorder %s188, %s202
      %p204 = scmp.eq.s32.totalorder %s31, 0
      %p205 = por %p203, %p204
      %s207 = sadd.s32 %s206, 1
      %p210 = scmp.eq.s32.totalorder %s25, 1
      %p211 = scmp.ne.s32.totalorder %s206, %s208
      %p212 = scmp.eq.s32.totalorder %s25, 0
      %p213 = por %p211, %p212
      %p214 = scmp.ne.s32.totalorder %s206, %s208
      %p215 = scmp.eq.s32.totalorder %s30, 1
      %p216 = por %p214, %p215
      %p217 = scmp.ne.s32.totalorder %s208, %s209
      %p218 = scmp.eq.s32.totalorder %s30, 0
      %p219 = por %p217, %p218
      %p220 = scmp.ne.s32.totalorder %s208, %s209
      %p221 = scmp.eq.s32.totalorder %s31, 1
      %p222 = por %p220, %p221
      %p224 = scmp.ne.s32.totalorder %s209, %s223
      %p225 = scmp.eq.s32.totalorder %s31, 0
      %p226 = por %p224, %p225
      %s228 = sadd.s32 %s227, 1
      %p231 = scmp.eq.s32.totalorder %s25, 1
      %p232 = scmp.ne.s32.totalorder %s227, %s229
      %p233 = scmp.eq.s32.totalorder %s25, 0
      %p234 = por %p232, %p233
      %p235 = scmp.ne.s32.totalorder %s227, %s229
      %p236 = scmp.eq.s32.totalorder %s30, 1
      %p237 = por %p235, %p236
      %p238 = scmp.ne.s32.totalorder %s229, %s230
      %p239 = scmp.eq.s32.totalorder %s30, 0
      %p240 = por %p238, %p239
      %p241 = scmp.ne.s32.totalorder %s229, %s230
      %p242 = scmp.eq.s32.totalorder %s31, 1
      %p243 = por %p241, %p242
      %p245 = scmp.ne.s32.totalorder %s230, %s244
      %p246 = scmp.eq.s32.totalorder %s31, 0
      %p247 = por %p245, %p246
      %s249 = sadd.s32 %s248, 1
      %p252 = scmp.eq.s32.totalorder %s25, 1
      %p253 = scmp.ne.s32.totalorder %s248, %s250
      %p254 = scmp.eq.s32.totalorder %s25, 0
      %p255 = por %p253, %p254
      %p256 = scmp.ne.s32.totalorder %s248, %s250
      %p257 = scmp.eq.s32.totalorder %s30, 1
      %p258 = por %p256, %p257
      %p259 = scmp.ne.s32.totalorder %s250, %s251
      %p260 = scmp.eq.s32.totalorder %s30, 0
      %p261 = por %p259, %p260
      %p262 = scmp.ne.s32.totalorder %s250, %s251
      %p263 = scmp.eq.s32.totalorder %s31, 1
      %p264 = por %p262, %p263
      %p266 = scmp.ne.s32.totalorder %s251, %s265
      %p267 = scmp.eq.s32.totalorder %s31, 0
      %p268 = por %p266, %p267
      %s270 = sadd.s32 %s269, 1
      %p273 = scmp.eq.s32.totalorder %s25, 1
      %p274 = scmp.ne.s32.totalorder %s269, %s271
      %p275 = scmp.eq.s32.totalorder %s25, 0
      %p276 = por %p274, %p275
      %p277 = scmp.ne.s32.totalorder %s269, %s271
      %p278 = scmp.eq.s32.totalorder %s30, 1
      %p279 = por %p277, %p278
      %p280 = scmp.ne.s32.totalorder %s271, %s272
      %p281 = scmp.eq.s32.totalorder %s30, 0
      %p282 = por %p280, %p281
      %p283 = scmp.ne.s32.totalorder %s271, %s272
      %p284 = scmp.eq.s32.totalorder %s31, 1
      %p285 = por %p283, %p284
      %p287 = scmp.ne.s32.totalorder %s272, %s286
      %p288 = scmp.eq.s32.totalorder %s31, 0
      %p289 = por %p287, %p288
      %s291 = sadd.s32 %s290, 1
      %p294 = scmp.eq.s32.totalorder %s25, 1
      %p295 = scmp.ne.s32.totalorder %s290, %s292
      %p296 = scmp.eq.s32.totalorder %s25, 0
      %p297 = por %p295, %p296
      %p298 = scmp.ne.s32.totalorder %s290, %s292
      %p299 = scmp.eq.s32.totalorder %s30, 1
      %p300 = por %p298, %p299
      %p301 = scmp.ne.s32.totalorder %s292, %s293
      %p302 = scmp.eq.s32.totalorder %s30, 0
      %p303 = por %p301, %p302
      %p304 = scmp.ne.s32.totalorder %s292, %s293
      %p305 = scmp.eq.s32.totalorder %s31, 1
      %p306 = por %p304, %p305
      %p308 = scmp.ne.s32.totalorder %s293, %s307
      %p309 = scmp.eq.s32.totalorder %s31, 0
      %p310 = por %p308, %p309
      %s311 = ssub.s32 %s25, %s32
      %p312 = scmp.eq.s32.totalorder %s311, 0
      %s314 = sadd.s32 %s313, 1
      %s315 = scalar_select %p312, %s313, %s314
      %p318 = pneg %p312
      %p319 = scmp.eq.s32.totalorder %s25, 1
      %p320 = por %p318, %p319
      %p321 = scmp.ne.s32.totalorder %s313, %s316
      %p322 = scmp.eq.s32.totalorder %s25, 0
      %p323 = por %p321, %p322
      %p324 = scmp.ne.s32.totalorder %s313, %s316
      %p325 = scmp.eq.s32.totalorder %s30, 1
      %p326 = por %p324, %p325
      %p327 = scmp.ne.s32.totalorder %s316, %s317
      %p328 = scmp.eq.s32.totalorder %s30, 0
      %p329 = por %p327, %p328
      %p330 = scmp.ne.s32.totalorder %s316, %s317
      %p331 = scmp.eq.s32.totalorder %s31, 1
      %p332 = por %p330, %p331
      %p334 = scmp.ne.s32.totalorder %s317, %s333
      %p335 = scmp.eq.s32.totalorder %s31, 0
      %p336 = por %p334, %p335
      %s338 = sadd.s32 %s337, 1
      %p341 = scmp.eq.s32.totalorder %s25, 1
      %p342 = scmp.ne.s32.totalorder %s337, %s339
      %p343 = scmp.eq.s32.totalorder %s25, 0
      %p344 = por %p342, %p343
      %p345 = scmp.ne.s32.totalorder %s337, %s339
      %p346 = scmp.eq.s32.totalorder %s30, 1
      %p347 = por %p345, %p346
      %p348 = scmp.ne.s32.totalorder %s339, %s340
      %p349 = scmp.eq.s32.totalorder %s30, 0
      %p350 = por %p348, %p349
      %p351 = scmp.ne.s32.totalorder %s339, %s340
      %p352 = scmp.eq.s32.totalorder %s31, 1
      %p353 = por %p351, %p352
      %p355 = scmp.ne.s32.totalorder %s340, %s354
      %p356 = scmp.eq.s32.totalorder %s31, 0
      %p357 = por %p355, %p356
      %p358 = scmp.le.s32.totalorder 1, %s25
      %p359 = scmp.lt.s32.totalorder %s25, 3
      %p360 = pnand %p358, %p359
      %p361 = pneg %p360
      // Predicated region
      $region9: #{ass_forward.1} parent=5 // pred_check
        _
      $region10: #{ass_forward.1} parent=5 // pred_check_branch
        %363 = sbr.rel (%p360) target = $region12
      $region11: #{ass_forward.1} parent=5 // pred_region
        %s364 = ssub.s32 %s25, 1
        // Predicated region
        $region13: #{ass_forward.1} parent=11 // pred_check
          %p365 = pneg %p46
        $region14: #{ass_forward.1} parent=11 // pred_check_branch
          %367 = sbr.rel (%p365) target = $region16
        $region15: #{ass_forward.1} parent=11 // pred_region
          _
        $region16: #{ass_forward.1} parent=11 // pred_fallthru
          _
        // Predicated region
        $region17: #{ass_forward.1} parent=11 // pred_check
          %p368 = pneg %p93
        $region18: #{ass_forward.1} parent=11 // pred_check_branch
          %370 = sbr.rel (%p368) target = $region20
        $region19: #{ass_forward.1} parent=11 // pred_region
          _
        $region20: #{ass_forward.1} parent=11 // pred_fallthru
          _
        // Predicated region
        $region21: #{ass_forward.1} parent=11 // pred_check
          %p371 = pneg %p114
        $region22: #{ass_forward.1} parent=11 // pred_check_branch
          %373 = sbr.rel (%p371) target = $region24
        $region23: #{ass_forward.1} parent=11 // pred_region
          %s375 = ssub.s32 16, 16
          %376 = vsyncadd [#allocation11], %s375
          %s378 = sshll.u32 [#allocation10], 4
          %s379 = int_to_ptr.vmem [resolvable:$true] %s378
          %381 = dma.hbm_to_vmem [thread:$0]  %s3, 16, %s379, [#allocation11]
        $region24: #{ass_forward.1} parent=11 // pred_fallthru
          _
        // Predicated region
        $region25: #{ass_forward.1} parent=11 // pred_check
          %p382 = pneg %p135
        $region26: #{ass_forward.1} parent=11 // pred_check_branch
          %384 = sbr.rel (%p382) target = $region28
        $region27: #{ass_forward.1} parent=11 // pred_region
          _
        $region28: #{ass_forward.1} parent=11 // pred_fallthru
          _
        // Predicated region
        $region29: #{ass_forward.1} parent=11 // pred_check
          %p385 = pneg %p156
        $region30: #{ass_forward.1} parent=11 // pred_check_branch
          %387 = sbr.rel (%p385) target = $region32
        $region31: #{ass_forward.1} parent=11 // pred_region
          %s389 = ssub.s32 16, 16
          %390 = vsyncadd [#allocation13], %s389
          %s392 = sshll.u32 [#allocation12], 4
          %s393 = int_to_ptr.vmem [resolvable:$true] %s392
          %395 = dma.hbm_to_vmem [thread:$0]  %s5, 16, %s393, [#allocation13]
        $region32: #{ass_forward.1} parent=11 // pred_fallthru
          _
        // Predicated region
        $region33: #{ass_forward.1} parent=11 // pred_check
          %p396 = pneg %p177
        $region34: #{ass_forward.1} parent=11 // pred_check_branch
          %398 = sbr.rel (%p396) target = $region36
        $region35: #{ass_forward.1} parent=11 // pred_region
          _
        $region36: #{ass_forward.1} parent=11 // pred_fallthru
          _
        // Predicated region
        $region37: #{ass_forward.1} parent=11 // pred_check
          %p399 = pneg %p198
        $region38: #{ass_forward.1} parent=11 // pred_check_branch
          %401 = sbr.rel (%p399) target = $region40
        $region39: #{ass_forward.1} parent=11 // pred_region
          _
        $region40: #{ass_forward.1} parent=11 // pred_fallthru
          _
        // Predicated region
        $region41: #{ass_forward.1} parent=11 // pred_check
          %p402 = pneg %p219
        $region42: #{ass_forward.1} parent=11 // pred_check_branch
          %404 = sbr.rel (%p402) target = $region44
        $region43: #{ass_forward.1} parent=11 // pred_region
          _
        $region44: #{ass_forward.1} parent=11 // pred_fallthru
          _
        // Predicated region
        $region45: #{ass_forward.1} parent=11 // pred_check
          %p405 = pneg %p240
        $region46: #{ass_forward.1} parent=11 // pred_check_branch
          %407 = sbr.rel (%p405) target = $region48
        $region47: #{ass_forward.1} parent=11 // pred_region
          _
        $region48: #{ass_forward.1} parent=11 // pred_fallthru
          _
        // Predicated region
        $region49: #{ass_forward.1} parent=11 // pred_check
          %p408 = pneg %p261
        $region50: #{ass_forward.1} parent=11 // pred_check_branch
          %410 = sbr.rel (%p408) target = $region52
        $region51: #{ass_forward.1} parent=11 // pred_region
          _
        $region52: #{ass_forward.1} parent=11 // pred_fallthru
          _
        // Predicated region
        $region53: #{ass_forward.1} parent=11 // pred_check
          %p411 = pneg %p282
        $region54: #{ass_forward.1} parent=11 // pred_check_branch
          %413 = sbr.rel (%p411) target = $region56
        $region55: #{ass_forward.1} parent=11 // pred_region
          _
        $region56: #{ass_forward.1} parent=11 // pred_fallthru
          _
        // Predicated region
        $region57: #{ass_forward.1} parent=11 // pred_check
          %p414 = pneg %p303
        $region58: #{ass_forward.1} parent=11 // pred_check_branch
          %416 = sbr.rel (%p414) target = $region60
        $region59: #{ass_forward.1} parent=11 // pred_region
          _
        $region60: #{ass_forward.1} parent=11 // pred_fallthru
          _
      $region12: #{ass_forward.1} parent=5 // pred_fallthru
        _
      %p417 = scmp.lt.s32.totalorder %s25, 2
      // Predicated region
      $region61: #{ass_forward.1} parent=5 // pred_check
        %p418 = pneg %p417
      $region62: #{ass_forward.1} parent=5 // pred_check_branch
        %420 = sbr.rel (%p418) target = $region64
      $region63: #{ass_forward.1} parent=5 // pred_region
        // Predicated region
        $region65: #{ass_forward.1} parent=63 // pred_check
          %p421 = pneg %p66
        $region66: #{ass_forward.1} parent=63 // pred_check_branch
          %423 = sbr.rel (%p421) target = $region68
        $region67: #{ass_forward.1} parent=63 // pred_region
          %s424 = smul.u32 2, %s25
          %p425 = scmp.lt.s32.totalorder %s424, 3
          %s426 = scalar_select %p425, %s424, 3
          %s427 = smul.addr %s426, 4
          %s428 = scalar_lea.vmem %s1, %s427
          %s429 = smul.u32 2, %s25
        $region68: #{ass_forward.1} parent=63 // pred_fallthru
          _
      $region64: #{ass_forward.1} parent=5 // pred_fallthru
        _
      %p430 = scmp.le.s32.totalorder 1, %s25
      %p431 = scmp.lt.s32.totalorder %s25, 3
      %p432 = pnand %p430, %p431
      %p433 = pneg %p432
      // Predicated region
      $region69: #{ass_forward.1} parent=5 // pred_check
        _
      $region70: #{ass_forward.1} parent=5 // pred_check_branch
        %435 = sbr.rel (%p432) target = $region72
      $region71: #{ass_forward.1} parent=5 // pred_region
        %s436 = ssub.s32 %s25, 1
        // Predicated region
        $region73: #{ass_forward.1} parent=71 // pred_check
          %p437 = pneg %p114
        $region74: #{ass_forward.1} parent=71 // pred_check_branch
          %439 = sbr.rel (%p437) target = $region76
        $region75: #{ass_forward.1} parent=71 // pred_region
          %440 = dma.done [#allocation11], 16
        $region76: #{ass_forward.1} parent=71 // pred_fallthru
          _
        // Predicated region
        $region77: #{ass_forward.1} parent=71 // pred_check
          %p441 = pneg %p156
        $region78: #{ass_forward.1} parent=71 // pred_check_branch
          %443 = sbr.rel (%p441) target = $region80
        $region79: #{ass_forward.1} parent=71 // pred_region
          %444 = dma.done [#allocation13], 16
        $region80: #{ass_forward.1} parent=71 // pred_fallthru
          _
        %p445 = pneg %p46
        %p446 = pneg %p43
        %s447 = smul.u32 2, %s30
        %p448 = scmp.lt.s32.totalorder %s447, 3
        %s449 = scalar_select %p448, %s447, 3
        %s450 = smul.addr %s449, 4
        %s451 = scalar_lea.vmem %s1, %s450
        %p452 = pneg %p72
        %p453 = pneg %p69
        %p454 = pneg %p93
        %p455 = pneg %p90
        %p456 = pneg %p114
        %p457 = pneg %p111
        %p458 = pneg %p135
        %p459 = pneg %p132
        %p460 = pneg %p156
        %p461 = pneg %p153
        %p462 = pneg %p177
        %p463 = pneg %p174
        %p464 = pneg %p198
        %p465 = pneg %p195
        %p466 = pneg %p219
        %p467 = pneg %p216
        %p468 = pneg %p240
        %p469 = pneg %p237
        %p470 = pneg %p261
        %p471 = pneg %p258
        %p472 = pneg %p282
        %p473 = pneg %p279
        %p474 = pneg %p303
        %p475 = pneg %p300
        %p476 = pneg %p329
        %p477 = pneg %p326
        %s478 = smul.u32 2, %s30
        %p479 = scmp.lt.s32.totalorder %s478, 3
        %s480 = scalar_select %p479, %s478, 3
        %s481 = smul.addr %s480, 8
        %s482 = scalar_lea.vmem %s13, %s481
        %p483 = pneg %p350
        %p484 = pneg %p347
        %s485 = smul.u32 2, %s30
        %p486 = scmp.lt.s32.totalorder %s485, 3
        %s487 = scalar_select %p486, %s485, 3
        %s488 = smul.addr %s487, 4
        %s489 = scalar_lea.vmem %s1, %s488
        %s490 = smul.u32 2, %s30
        %s491 = smul.u32 2, %s30
        %p492 = scmp.lt.s32.totalorder %s491, 3
        %s493 = scalar_select %p492, %s491, 3
        %s494 = smul.addr %s493, 8
        %s495 = scalar_lea.vmem %s13, %s494
        %s496 = smul.u32 2, %s30
        %p497 = scmp.eq.s32.totalorder %s30, 0
        // Predicated region
        $region81: #{ass_forward.1} parent=71 // pred_check
          %p498 = pneg %p497
        $region82: #{ass_forward.1} parent=71 // pred_check_branch
          %500 = sbr.rel (%p498) target = $region84
        $region83: #{ass_forward.1} parent=71 // pred_region
          %v501 = vld [vmem:[%s0] sm:$0xff]
          %v502 = vld [vmem:[%s0 + $0x8] sm:$0xff]
          %v503 = vld [vmem:[%s0 + $0x10] sm:$0xff]
          %v504 = vld [vmem:[%s0 + $0x18] sm:$0xff]
          %v505 = vld [vmem:[%s2] sm:$0xff]
          %v506 = vld [vmem:[%s2 + $0x8] sm:$0xff]
          %v507 = vld [vmem:[%s2 + $0x10] sm:$0xff]
          %v508 = vld [vmem:[%s2 + $0x18] sm:$0xff]
          %v509 = vld [vmem:[#allocation10] sm:$0x1]
          %v511 = vlaneseq
          %v512 = vshrl.u32 %v511, 7
          %v513 = vsub.s32 0, %v512
          %v514 = vrot.slane %v509, %v513
          %vm516 = vcmask 261120
          %v518 = vsel %vm516, %v501, 0
          %v521 = vsel %vm516, %v502, 0
          %v524 = vsel %vm516, %v503, 0
          %v527 = vsel %vm516, %v504, 0
          %529 = vmatprep.subr.mxu0 0.0
          %530 = vmatpush1.msra.mxu0 %v505
          %531 = vmatprep.subr.mxu0 0.0
          %532 = vmatpush1.msra.mxu0 %v506
          %533 = vmatprep.subr.mxu0 0.0
          %534 = vmatpush1.msra.mxu0 %v507
          %535 = vmatprep.subr.mxu0 0.0
          %536 = vmatpush1.msra.mxu0 %v508
          %537 = vmatprep.subr.mxu0 0.0
          %538 = vmatpush1.msra.mxu0 0.0
          %539 = vmatprep.subr.mxu0 0.0
          %540 = vmatpush1.msra.mxu0 0.0
          %541 = vmatprep.subr.mxu0 0.0
          %542 = vmatpush1.msra.mxu0 0.0
          %543 = vmatprep.subr.mxu0 0.0
          %544 = vmatpush1.msra.mxu0 0.0
          %545 = vmatprep.subr.mxu0 0.0
          %546 = vmatpush1.msra.mxu0 0.0
          %547 = vmatprep.subr.mxu0 0.0
          %548 = vmatpush1.msra.mxu0 0.0
          %549 = vmatprep.subr.mxu0 0.0
          %550 = vmatpush1.msra.mxu0 0.0
          %551 = vmatprep.subr.mxu0 0.0
          %552 = vmatpush1.msra.mxu0 0.0
          %553 = vmatprep.subr.mxu0 0.0
          %554 = vmatpush1.msra.mxu0 0.0
          %555 = vmatprep.subr.mxu0 0.0
          %556 = vmatpush1.msra.mxu0 0.0
          %557 = vmatprep.subr.mxu0 0.0
          %558 = vmatpush1.msra.mxu0 0.0
          %559 = vmatprep.subr.mxu0 0.0
          %560 = vmatpush1.msra.mxu0 0.0
          %561 = vmatprep.subr.mxu0 0.0
          %562 = vmatpush1.msra.mxu0 0.0
          %563 = vmatprep.subr.mxu0 0.0
          %564 = vmatpush1.msra.mxu0 0.0
          %565 = vmatprep.subr.mxu0 0.0
          %566 = vmatpush1.msra.mxu0 0.0
          %567 = vmatprep.subr.mxu0 0.0
          %568 = vmatpush1.msra.mxu0 0.0
          %569 = vmatprep.subr.mxu0 0.0
          %570 = vmatpush1.msra.mxu0 0.0
          %571 = vmatprep.subr.mxu0 0.0
          %572 = vmatpush1.msra.mxu0 0.0
          %573 = vmatprep.subr.mxu0 0.0
          %574 = vmatpush1.msra.mxu0 0.0
          %575 = vmatprep.subr.mxu0 0.0
          %576 = vmatpush1.msra.mxu0 0.0
          %577 = vmatprep.subr.mxu0 0.0
          %578 = vmatpush1.msra.mxu0 0.0
          %579 = vmatprep.subr.mxu0 0.0
          %580 = vmatpush1.msra.mxu0 0.0
          %581 = vmatprep.subr.mxu0 0.0
          %582 = vmatpush1.msra.mxu0 0.0
          %583 = vmatprep.subr.mxu0 0.0
          %584 = vmatpush1.msra.mxu0 0.0
          %585 = vmatprep.subr.mxu0 0.0
          %586 = vmatpush1.msra.mxu0 0.0
          %587 = vmatprep.subr.mxu0 0.0
          %588 = vmatpush1.msra.mxu0 0.0
          %589 = vmatprep.subr.mxu0 0.0
          %590 = vmatpush1.msra.mxu0 0.0
          %591 = vmatprep.subr.mxu0 0.0
          %592 = vmatpush1.msra.mxu0 0.0
          %593 = vmatprep.mubr.f32.mxu0 0.0
          %594 = vmatmul.mubr.f32.gmra.mrb[0].mxu0 %v518
          %v595 = vpop.f32.mrb[0].mxu0
          %v596 = vadd.f32 %v514, %v595
          %v597 = vpop.f32.mrb[0].mxu0
          %598 = vmatprep.mubr.f32.mxu0 0.0
          %599 = vmatmul.mubr.f32.gmra.mrb[0].mxu0 %v521
          %v600 = vpop.f32.mrb[0].mxu0
          %v601 = vadd.f32 %v514, %v600
          %v602 = vpop.f32.mrb[0].mxu0
          %603 = vmatprep.mubr.f32.mxu0 0.0
          %604 = vmatmul.mubr.f32.gmra.mrb[0].mxu0 %v524
          %v605 = vpop.f32.mrb[0].mxu0
          %v606 = vadd.f32 %v514, %v605
          %v607 = vpop.f32.mrb[0].mxu0
          %608 = vmatprep.mubr.f32.mxu0 0.0
          %609 = vmatmul.mubr.f32.gmra.mrb[0].mxu0 %v527
          %v610 = vpop.f32.mrb[0].mxu0
          %v611 = vadd.f32 %v514, %v610
          %v612 = vpop.f32.mrb[0].mxu0
          %613 = vdwg.mxu0
          %614 = vst.msk [vmem:[#allocation2] sm:$0xff] %vm516, %v596
          %615 = vst.msk [vmem:[#allocation2 + $0x8] sm:$0xff] %vm516, %v601
          %616 = vst.msk [vmem:[#allocation2 + $0x10] sm:$0xff] %vm516, %v606
          %617 = vst.msk [vmem:[#allocation2 + $0x18] sm:$0xff] %vm516, %v611
          %v618 = vld [vmem:[%s4] sm:$0xff]
          %v619 = vld [vmem:[%s4 + $0x8] sm:$0xff]
          %v620 = vld [vmem:[%s4 + $0x10] sm:$0xff]
          %v621 = vld [vmem:[%s4 + $0x18] sm:$0xff]
          %v622 = vld [vmem:[#allocation12] sm:$0x1]
          %v624 = vlaneseq
          %v625 = vshrl.u32 %v624, 7
          %v626 = vsub.s32 0, %v625
          %v627 = vrot.slane %v622, %v626
          %629 = vmatprep.subr.mxu0 0.0
          %630 = vmatpush1.msra.mxu0 %v618
          %631 = vmatprep.subr.mxu0 0.0
          %632 = vmatpush1.msra.mxu0 %v619
          %633 = vmatprep.subr.mxu0 0.0
          %634 = vmatpush1.msra.mxu0 %v620
          %635 = vmatprep.subr.mxu0 0.0
          %636 = vmatpush1.msra.mxu0 %v621
          %637 = vmatprep.subr.mxu0 0.0
          %638 = vmatpush1.msra.mxu0 0.0
          %639 = vmatprep.subr.mxu0 0.0
          %640 = vmatpush1.msra.mxu0 0.0
          %641 = vmatprep.subr.mxu0 0.0
          %642 = vmatpush1.msra.mxu0 0.0
          %643 = vmatprep.subr.mxu0 0.0
          %644 = vmatpush1.msra.mxu0 0.0
          %645 = vmatprep.subr.mxu0 0.0
          %646 = vmatpush1.msra.mxu0 0.0
          %647 = vmatprep.subr.mxu0 0.0
          %648 = vmatpush1.msra.mxu0 0.0
          %649 = vmatprep.subr.mxu0 0.0
          %650 = vmatpush1.msra.mxu0 0.0
          %651 = vmatprep.subr.mxu0 0.0
          %652 = vmatpush1.msra.mxu0 0.0
          %653 = vmatprep.subr.mxu0 0.0
          %654 = vmatpush1.msra.mxu0 0.0
          %655 = vmatprep.subr.mxu0 0.0
          %656 = vmatpush1.msra.mxu0 0.0
          %657 = vmatprep.subr.mxu0 0.0
          %658 = vmatpush1.msra.mxu0 0.0
          %659 = vmatprep.subr.mxu0 0.0
          %660 = vmatpush1.msra.mxu0 0.0
          %661 = vmatprep.subr.mxu0 0.0
          %662 = vmatpush1.msra.mxu0 0.0
          %663 = vmatprep.subr.mxu0 0.0
          %664 = vmatpush1.msra.mxu0 0.0
          %665 = vmatprep.subr.mxu0 0.0
          %666 = vmatpush1.msra.mxu0 0.0
          %667 = vmatprep.subr.mxu0 0.0
          %668 = vmatpush1.msra.mxu0 0.0
          %669 = vmatprep.subr.mxu0 0.0
          %670 = vmatpush1.msra.mxu0 0.0
          %671 = vmatprep.subr.mxu0 0.0
          %672 = vmatpush1.msra.mxu0 0.0
          %673 = vmatprep.subr.mxu0 0.0
          %674 = vmatpush1.msra.mxu0 0.0
          %675 = vmatprep.subr.mxu0 0.0
          %676 = vmatpush1.msra.mxu0 0.0
          %677 = vmatprep.subr.mxu0 0.0
          %678 = vmatpush1.msra.mxu0 0.0
          %679 = vmatprep.subr.mxu0 0.0
          %680 = vmatpush1.msra.mxu0 0.0
          %681 = vmatprep.subr.mxu0 0.0
          %682 = vmatpush1.msra.mxu0 0.0
          %683 = vmatprep.subr.mxu0 0.0
          %684 = vmatpush1.msra.mxu0 0.0
          %685 = vmatprep.subr.mxu0 0.0
          %686 = vmatpush1.msra.mxu0 0.0
          %687 = vmatprep.subr.mxu0 0.0
          %688 = vmatpush1.msra.mxu0 0.0
          %689 = vmatprep.subr.mxu0 0.0
          %690 = vmatpush1.msra.mxu0 0.0
          %691 = vmatprep.subr.mxu0 0.0
          %692 = vmatpush1.msra.mxu0 0.0
          %693 = vmatprep.mubr.f32.mxu0 0.0
          %694 = vmatmul.mubr.f32.gmra.mrb[0].mxu0 %v518
          %v695 = vpop.f32.mrb[0].mxu0
          %v696 = vadd.f32 %v627, %v695
          %v697 = vpop.f32.mrb[0].mxu0
          %698 = vmatprep.mubr.f32.mxu0 0.0
          %699 = vmatmul.mubr.f32.gmra.mrb[0].mxu0 %v521
          %v700 = vpop.f32.mrb[0].mxu0
          %v701 = vadd.f32 %v627, %v700
          %v702 = vpop.f32.mrb[0].mxu0
          %703 = vmatprep.mubr.f32.mxu0 0.0
          %704 = vmatmul.mubr.f32.gmra.mrb[0].mxu0 %v524
          %v705 = vpop.f32.mrb[0].mxu0
          %v706 = vadd.f32 %v627, %v705
          %v707 = vpop.f32.mrb[0].mxu0
          %708 = vmatprep.mubr.f32.mxu0 0.0
          %709 = vmatmul.mubr.f32.gmra.mrb[0].mxu0 %v527
          %v710 = vpop.f32.mrb[0].mxu0
          %v711 = vadd.f32 %v627, %v710
          %v712 = vpop.f32.mrb[0].mxu0
          %713 = vdwg.mxu0
          %vm714 = vcmask 64512
          %715 = vst.msk [vmem:[#allocation3] sm:$0xff] %vm714, %v696
          %716 = vst.msk [vmem:[#allocation3 + $0x8] sm:$0xff] %vm714, %v701
          %717 = vst.msk [vmem:[#allocation3 + $0x10] sm:$0xff] %vm714, %v706
          %718 = vst.msk [vmem:[#allocation3 + $0x18] sm:$0xff] %vm714, %v711
          %v719 = vld [vmem:[%s7] sm:$0xff]
          %v720 = vld [vmem:[#allocation9] sm:$0x1]
          %v722 = vlaneseq
          %v723 = vshrl.u32 %v722, 7
          %v724 = vsub.s32 0, %v723
          %v725 = vrot.slane %v720, %v724
          %v728 = vsel %vm714, %v696, 0
          %v731 = vsel %vm714, %v701, 0
          %v734 = vsel %vm714, %v706, 0
          %v737 = vsel %vm714, %v711, 0
          %739 = vmatprep.subr.mxu0 0.0
          %740 = vmatpush1.msra.mxu0 %v719
          %741 = vmatprep.subr.mxu0 0.0
          %742 = vmatpush1.msra.mxu0 0.0
          %743 = vmatprep.subr.mxu0 0.0
          %744 = vmatpush1.msra.mxu0 0.0
          %745 = vmatprep.subr.mxu0 0.0
          %746 = vmatpush1.msra.mxu0 0.0
          %747 = vmatprep.subr.mxu0 0.0
          %748 = vmatpush1.msra.mxu0 0.0
          %749 = vmatprep.subr.mxu0 0.0
          %750 = vmatpush1.msra.mxu0 0.0
          %751 = vmatprep.subr.mxu0 0.0
          %752 = vmatpush1.msra.mxu0 0.0
          %753 = vmatprep.subr.mxu0 0.0
          %754 = vmatpush1.msra.mxu0 0.0
          %755 = vmatprep.subr.mxu0 0.0
          %756 = vmatpush1.msra.mxu0 0.0
          %757 = vmatprep.subr.mxu0 0.0
          %758 = vmatpush1.msra.mxu0 0.0
          %759 = vmatprep.subr.mxu0 0.0
          %760 = vmatpush1.msra.mxu0 0.0
          %761 = vmatprep.subr.mxu0 0.0
          %762 = vmatpush1.msra.mxu0 0.0
          %763 = vmatprep.subr.mxu0 0.0
          %764 = vmatpush1.msra.mxu0 0.0
          %765 = vmatprep.subr.mxu0 0.0
          %766 = vmatpush1.msra.mxu0 0.0
          %767 = vmatprep.subr.mxu0 0.0
          %768 = vmatpush1.msra.mxu0 0.0
          %769 = vmatprep.subr.mxu0 0.0
          %770 = vmatpush1.msra.mxu0 0.0
          %771 = vmatprep.subr.mxu0 0.0
          %772 = vmatpush1.msra.mxu0 0.0
          %773 = vmatprep.subr.mxu0 0.0
          %774 = vmatpush1.msra.mxu0 0.0
          %775 = vmatprep.subr.mxu0 0.0
          %776 = vmatpush1.msra.mxu0 0.0
          %777 = vmatprep.subr.mxu0 0.0
          %778 = vmatpush1.msra.mxu0 0.0
          %779 = vmatprep.subr.mxu0 0.0
          %780 = vmatpush1.msra.mxu0 0.0
          %781 = vmatprep.subr.mxu0 0.0
          %782 = vmatpush1.msra.mxu0 0.0
          %783 = vmatprep.subr.mxu0 0.0
          %784 = vmatpush1.msra.mxu0 0.0
          %785 = vmatprep.subr.mxu0 0.0
          %786 = vmatpush1.msra.mxu0 0.0
          %787 = vmatprep.subr.mxu0 0.0
          %788 = vmatpush1.msra.mxu0 0.0
          %789 = vmatprep.subr.mxu0 0.0
          %790 = vmatpush1.msra.mxu0 0.0
          %791 = vmatprep.subr.mxu0 0.0
          %792 = vmatpush1.msra.mxu0 0.0
          %793 = vmatprep.subr.mxu0 0.0
          %794 = vmatpush1.msra.mxu0 0.0
          %795 = vmatprep.subr.mxu0 0.0
          %796 = vmatpush1.msra.mxu0 0.0
          %797 = vmatprep.subr.mxu0 0.0
          %798 = vmatpush1.msra.mxu0 0.0
          %799 = vmatprep.subr.mxu0 0.0
          %800 = vmatpush1.msra.mxu0 0.0
          %801 = vmatprep.subr.mxu0 0.0
          %802 = vmatpush1.msra.mxu0 0.0
          %803 = vmatprep.mubr.f32.mxu0 0.0
          %804 = vmatmul.mubr.f32.gmra.mrb[0].mxu0 %v728
          %v805 = vpop.f32.mrb[0].mxu0
          %v806 = vadd.f32 %v725, %v805
          %v807 = vpop.f32.mrb[0].mxu0
          %808 = vmatprep.mubr.f32.mxu0 0.0
          %809 = vmatmul.mubr.f32.gmra.mrb[0].mxu0 %v731
          %v810 = vpop.f32.mrb[0].mxu0
          %v811 = vadd.f32 %v725, %v810
          %v812 = vpop.f32.mrb[0].mxu0
          %813 = vmatprep.mubr.f32.mxu0 0.0
          %814 = vmatmul.mubr.f32.gmra.mrb[0].mxu0 %v734
          %v815 = vpop.f32.mrb[0].mxu0
          %v816 = vadd.f32 %v725, %v815
          %v817 = vpop.f32.mrb[0].mxu0
          %818 = vmatprep.mubr.f32.mxu0 0.0
          %819 = vmatmul.mubr.f32.gmra.mrb[0].mxu0 %v737
          %v820 = vpop.f32.mrb[0].mxu0
          %v821 = vadd.f32 %v725, %v820
          %v822 = vpop.f32.mrb[0].mxu0
          %823 = vdwg.mxu0
          %vm824 = vcmask 7168
          %825 = vst.msk [vmem:[#allocation4] sm:$0xff] %vm824, %v806
          %826 = vst.msk [vmem:[#allocation4 + $0x8] sm:$0xff] %vm824, %v811
          %827 = vst.msk [vmem:[#allocation4 + $0x10] sm:$0xff] %vm824, %v816
          %828 = vst.msk [vmem:[#allocation4 + $0x18] sm:$0xff] %vm824, %v821
          %v829 = vld [vmem:[%s6] sm:$0xff]
          %830 = vxpose.xlu0.b32.start [1/16] %v829, 128
          %831 = vxpose.xlu0.b32.cont [2/16] 0.0, 128
          %832 = vxpose.xlu0.b32.cont [3/16] 0.0, 128
          %833 = vxpose.xlu0.b32.cont [4/16] 0.0, 128
          %834 = vxpose.xlu0.b32.cont [5/16] 0.0, 128
          %835 = vxpose.xlu0.b32.cont [6/16] 0.0, 128
          %836 = vxpose.xlu0.b32.cont [7/16] 0.0, 128
          %837 = vxpose.xlu0.b32.cont [8/16] 0.0, 128
          %838 = vxpose.xlu0.b32.cont [9/16] 0.0, 128
          %839 = vxpose.xlu0.b32.cont [10/16] 0.0, 128
          %840 = vxpose.xlu0.b32.cont [11/16] 0.0, 128
          %841 = vxpose.xlu0.b32.cont [12/16] 0.0, 128
          %842 = vxpose.xlu0.b32.cont [13/16] 0.0, 128
          %843 = vxpose.xlu0.b32.cont [14/16] 0.0, 128
          %844 = vxpose.xlu0.b32.cont [15/16] 0.0, 128
          %845 = vxpose.xlu0.b32.end [16/16] 0.0, 128
          %v846 = vpop.trf.xlu0
          %v847 = vpop.trf.xlu0
          %v848 = vpop.trf.xlu0
          %v849 = vpop.trf.xlu0
          %v850 = vpop.trf.xlu0
          %v851 = vpop.trf.xlu0
          %v852 = vpop.trf.xlu0
          %v853 = vpop.trf.xlu0
          %v854 = vpop.trf.xlu0
          %v855 = vpop.trf.xlu0
          %v856 = vpop.trf.xlu0
          %v857 = vpop.trf.xlu0
          %v858 = vpop.trf.xlu0
          %v859 = vpop.trf.xlu0
          %v860 = vpop.trf.xlu0
          %v861 = vpop.trf.xlu0
          %v863 = vsel %vm714, %v846, 0
          %865 = vmatprep.subr.mxu0 0.0
          %866 = vmatpush1.xpose.msra.mxu0 %v728
          %867 = vmatprep.subr.mxu0 0.0
          %868 = vmatpush1.xpose.msra.mxu0 %v731
          %869 = vmatprep.subr.mxu0 0.0
          %870 = vmatpush1.xpose.msra.mxu0 %v734
          %871 = vmatprep.subr.mxu0 0.0
          %872 = vmatpush1.xpose.msra.mxu0 %v737
          %873 = vmatprep.subr.mxu0 0.0
          %874 = vmatpush1.xpose.msra.mxu0 0.0
          %875 = vmatprep.subr.mxu0 0.0
          %876 = vmatpush1.xpose.msra.mxu0 0.0
          %877 = vmatprep.subr.mxu0 0.0
          %878 = vmatpush1.xpose.msra.mxu0 0.0
          %879 = vmatprep.subr.mxu0 0.0
          %880 = vmatpush1.xpose.msra.mxu0 0.0
          %881 = vmatprep.subr.mxu0 0.0
          %882 = vmatpush1.xpose.msra.mxu0 0.0
          %883 = vmatprep.subr.mxu0 0.0
          %884 = vmatpush1.xpose.msra.mxu0 0.0
          %885 = vmatprep.subr.mxu0 0.0
          %886 = vmatpush1.xpose.msra.mxu0 0.0
          %887 = vmatprep.subr.mxu0 0.0
          %888 = vmatpush1.xpose.msra.mxu0 0.0
          %889 = vmatprep.subr.mxu0 0.0
          %890 = vmatpush1.xpose.msra.mxu0 0.0
          %891 = vmatprep.subr.mxu0 0.0
          %892 = vmatpush1.xpose.msra.mxu0 0.0
          %893 = vmatprep.subr.mxu0 0.0
          %894 = vmatpush1.xpose.msra.mxu0 0.0
          %895 = vmatprep.subr.mxu0 0.0
          %896 = vmatpush1.xpose.msra.mxu0 0.0
          %897 = vmatprep.subr.mxu0 0.0
          %898 = vmatpush1.xpose.msra.mxu0 0.0
          %899 = vmatprep.subr.mxu0 0.0
          %900 = vmatpush1.xpose.msra.mxu0 0.0
          %901 = vmatprep.subr.mxu0 0.0
          %902 = vmatpush1.xpose.msra.mxu0 0.0
          %903 = vmatprep.subr.mxu0 0.0
          %904 = vmatpush1.xpose.msra.mxu0 0.0
          %905 = vmatprep.subr.mxu0 0.0
          %906 = vmatpush1.xpose.msra.mxu0 0.0
          %907 = vmatprep.subr.mxu0 0.0
          %908 = vmatpush1.xpose.msra.mxu0 0.0
          %909 = vmatprep.subr.mxu0 0.0
          %910 = vmatpush1.xpose.msra.mxu0 0.0
          %911 = vmatprep.subr.mxu0 0.0
          %912 = vmatpush1.xpose.msra.mxu0 0.0
          %913 = vmatprep.subr.mxu0 0.0
          %914 = vmatpush1.xpose.msra.mxu0 0.0
          %915 = vmatprep.subr.mxu0 0.0
          %916 = vmatpush1.xpose.msra.mxu0 0.0
          %917 = vmatprep.subr.mxu0 0.0
          %918 = vmatpush1.xpose.msra.mxu0 0.0
          %919 = vmatprep.subr.mxu0 0.0
          %920 = vmatpush1.xpose.msra.mxu0 0.0
          %921 = vmatprep.subr.mxu0 0.0
          %922 = vmatpush1.xpose.msra.mxu0 0.0
          %923 = vmatprep.subr.mxu0 0.0
          %924 = vmatpush1.xpose.msra.mxu0 0.0
          %925 = vmatprep.subr.mxu0 0.0
          %926 = vmatpush1.xpose.msra.mxu0 0.0
          %927 = vmatprep.subr.mxu0 0.0
          %928 = vmatpush1.xpose.msra.mxu0 0.0
          %929 = vmatprep.mubr.f32.mxu0 0.0
          %930 = vmatmul.mubr.f32.gmra.mrb[0].mxu0 %v863
          %v931 = vpop.f32.mrb[0].mxu0
          %v932 = vadd.f32 0.0, %v931
          %v933 = vpop.f32.mrb[0].mxu0
          %934 = vdwg.mxu0
          %vm935 = vcmask 253952
          %936 = vst.msk [vmem:[#allocation5] sm:$0x1] %vm935, %v932
          %937 = vst.msk [vmem:[#allocation7] sm:$0xff] %vm516, 0.0
          %938 = vst.msk [vmem:[#allocation8] sm:$0xff] %vm516, 0.0
        $region84: #{ass_forward.1} parent=71 // pred_fallthru
          _
        %v939 = vld [vmem:[%s489] sm:$0xf]
        %v940 = vld [vmem:[%s489 + $0x4] sm:$0xf]
        %v941 = vunpack.c.l.bf16 %v939
        %v942 = vunpack.c.l.bf16 %v940
        %v943 = vld [vmem:[#allocation2] sm:$0xff]
        %v944 = vld [vmem:[#allocation2 + $0x8] sm:$0xff]
        %v945 = vld [vmem:[#allocation2 + $0x10] sm:$0xff]
        %v946 = vld [vmem:[#allocation2 + $0x18] sm:$0xff]
        %v947 = vld [vmem:[#allocation3] sm:$0xff]
        %v948 = vld [vmem:[#allocation3 + $0x8] sm:$0xff]
        %v949 = vld [vmem:[#allocation3 + $0x10] sm:$0xff]
        %v950 = vld [vmem:[#allocation3 + $0x18] sm:$0xff]
        %s951 = smul.u32 %s30, 16
        %vm952 = vcmask 261120
        %v953 = vsel %vm952, %v941, 0.0
        %954 = vadd.xlane.f32.xlu0 %v953
        %v955 = vpop.xlane.xlu0 %954
        %v956 = vsel %vm952, %v942, 0.0
        %957 = vadd.xlane.f32.xlu0 %v956
        %v958 = vpop.xlane.xlu0 %957
        %v960 = vsel %vm952, %v941, 0
        %v963 = vsel %vm952, %v942, 0
        %965 = vmatprep.subr.mxu0 0.0
        %966 = vmatpush1.msra.mxu0 %v943
        %967 = vmatprep.subr.mxu0 0.0
        %968 = vmatpush1.msra.mxu0 %v944
        %969 = vmatprep.subr.mxu0 0.0
        %970 = vmatpush1.msra.mxu0 %v945
        %971 = vmatprep.subr.mxu0 0.0
        %972 = vmatpush1.msra.mxu0 %v946
        %973 = vmatprep.subr.mxu0 0.0
        %974 = vmatpush1.msra.mxu0 0.0
        %975 = vmatprep.subr.mxu0 0.0
        %976 = vmatpush1.msra.mxu0 0.0
        %977 = vmatprep.subr.mxu0 0.0
        %978 = vmatpush1.msra.mxu0 0.0
        %979 = vmatprep.subr.mxu0 0.0
        %980 = vmatpush1.msra.mxu0 0.0
        %981 = vmatprep.subr.mxu0 0.0
        %982 = vmatpush1.msra.mxu0 0.0
        %983 = vmatprep.subr.mxu0 0.0
        %984 = vmatpush1.msra.mxu0 0.0
        %985 = vmatprep.subr.mxu0 0.0
        %986 = vmatpush1.msra.mxu0 0.0
        %987 = vmatprep.subr.mxu0 0.0
        %988 = vmatpush1.msra.mxu0 0.0
        %989 = vmatprep.subr.mxu0 0.0
        %990 = vmatpush1.msra.mxu0 0.0
        %991 = vmatprep.subr.mxu0 0.0
        %992 = vmatpush1.msra.mxu0 0.0
        %993 = vmatprep.subr.mxu0 0.0
        %994 = vmatpush1.msra.mxu0 0.0
        %995 = vmatprep.subr.mxu0 0.0
        %996 = vmatpush1.msra.mxu0 0.0
        %997 = vmatprep.subr.mxu0 0.0
        %998 = vmatpush1.msra.mxu0 0.0
        %999 = vmatprep.subr.mxu0 0.0
        %1000 = vmatpush1.msra.mxu0 0.0
        %1001 = vmatprep.subr.mxu0 0.0
        %1002 = vmatpush1.msra.mxu0 0.0
        %1003 = vmatprep.subr.mxu0 0.0
        %1004 = vmatpush1.msra.mxu0 0.0
        %1005 = vmatprep.subr.mxu0 0.0
        %1006 = vmatpush1.msra.mxu0 0.0
        %1007 = vmatprep.subr.mxu0 0.0
        %1008 = vmatpush1.msra.mxu0 0.0
        %1009 = vmatprep.subr.mxu0 0.0
        %1010 = vmatpush1.msra.mxu0 0.0
        %1011 = vmatprep.subr.mxu0 0.0
        %1012 = vmatpush1.msra.mxu0 0.0
        %1013 = vmatprep.subr.mxu0 0.0
        %1014 = vmatpush1.msra.mxu0 0.0
        %1015 = vmatprep.subr.mxu0 0.0
        %1016 = vmatpush1.msra.mxu0 0.0
        %1017 = vmatprep.subr.mxu0 0.0
        %1018 = vmatpush1.msra.mxu0 0.0
        %1019 = vmatprep.subr.mxu0 0.0
        %1020 = vmatpush1.msra.mxu0 0.0
        %1021 = vmatprep.subr.mxu0 0.0
        %1022 = vmatpush1.msra.mxu0 0.0
        %1023 = vmatprep.subr.mxu0 0.0
        %1024 = vmatpush1.msra.mxu0 0.0
        %1025 = vmatprep.subr.mxu0 0.0
        %1026 = vmatpush1.msra.mxu0 0.0
        %1027 = vmatprep.subr.mxu0 0.0
        %1028 = vmatpush1.msra.mxu0 0.0
        %1029 = vmatprep.mubr.f32.mxu0 0.0
        %1030 = vmatmul.mubr.f32.gmra.mrb[0].mxu0 %v960
        %v1031 = vpop.f32.mrb[0].mxu0
        %v1032 = vadd.f32 0.0, %v1031
        %v1033 = vpop.f32.mrb[0].mxu0
        %1034 = vmatprep.mubr.f32.mxu0 0.0
        %1035 = vmatmul.mubr.f32.gmra.mrb[0].mxu0 %v963
        %v1036 = vpop.f32.mrb[0].mxu0
        %v1037 = vadd.f32 0.0, %v1036
        %v1038 = vpop.f32.mrb[0].mxu0
        %1039 = vdwg.mxu0
        %v1040 = vmax.f32 %v955, 1.0
        %v1041 = vmax.f32 %v958, 1.0
        %v1042 = vrcp.pop %v1040
        %v1043 = vmul.f32 %v1032, %v1042
        %v1044 = vrcp.pop %v1041
        %v1045 = vmul.f32 %v1037, %v1044
        %s1046 = scalar_lea.vmem [#allocation4], %s951
        %v1047 = vld [vmem:[%s1046] sm:$0xff]
        %v1048 = vld [vmem:[%s1046 + $0x8] sm:$0xff]
        %v1049 = vld [vmem:[#allocation5] sm:$0x1]
        %1051 = vset.pattern.permute.xlu0 0
        %1052 = vperm.xlu0 %1051, %v1047
        %v1053 = vpop.permute.xlu0 %1052
        %1056 = vset.pattern.permute.xlu0 0
        %1057 = vperm.xlu0 %1056, %v1048
        %v1058 = vpop.permute.xlu0 %1057
        %v1061 = vlaneseq
        %v1062 = vshrl.u32 %v1061, 7
        %v1063 = vsub.s32 0, %v1062
        %v1064 = vrot.slane %v1049, %v1063
        %v1066 = vadd.f32 %v1053, %v1064
        %v1067 = vadd.f32 %v1058, %v1064
        %vm1068 = vcmp.gt.f32.partialorder %v1066, 0.0
        %vm1069 = vcmp.gt.f32.partialorder %v1067, 0.0
        %v1070 = vmul.f32 %v1066, 0.01
        %v1071 = vmul.f32 %v1067, 0.01
        %v1072 = vsel %vm1068, %v1066, %v1070
        %v1073 = vsel %vm1069, %v1067, %v1071
        %vm1074 = vcmp.gt.f32.partialorder %v941, 0.0
        %vm1075 = vcmp.gt.f32.partialorder %v942, 0.0
        %v1076 = vsel %vm1074, %v1072, -1e+30
        %v1077 = vsel %vm1075, %v1073, -1e+30
        %v1078 = vsel %vm952, %v1076, -inf
        %1079 = vmax.xlane.f32.xlu0 %v1078
        %v1080 = vpop.xlane.xlu0 %1079
        %v1081 = vsel %vm952, %v1077, -inf
        %1082 = vmax.xlane.f32.xlu0 %v1081
        %v1083 = vpop.xlane.xlu0 %1082
        %v1084 = vsub.f32 %v1076, %v1080
        %v1085 = vsub.f32 %v1077, %v1083
        %v1086 = vmul.f32 %v1084, 1.442695
        %v1087 = vpow.pop %v1086
        %v1088 = vmul.f32 %v1085, 1.442695
        %v1089 = vpow.pop %v1088
        %v1090 = vmul.f32 %v1087, %v941
        %v1091 = vmul.f32 %v1089, %v942
        %v1092 = vsel %vm952, %v1090, 0.0
        %1093 = vadd.xlane.f32.xlu0 %v1092
        %v1094 = vpop.xlane.xlu0 %1093
        %v1095 = vsel %vm952, %v1091, 0.0
        %1096 = vadd.xlane.f32.xlu0 %v1095
        %v1097 = vpop.xlane.xlu0 %1096
        %v1098 = vmax.f32 %v1094, 1e-30
        %v1099 = vmax.f32 %v1097, 1e-30
        %v1100 = vrcp.pop %v1098
        %v1101 = vmul.f32 1.0, %v1100
        %v1102 = vrcp.pop %v1099
        %v1103 = vmul.f32 1.0, %v1102
        %v1104 = vmul.f32 %v1090, %v1101
        %v1105 = vmul.f32 %v1091, %v1103
        %v1107 = vsel %vm952, %v1104, 0
        %v1110 = vsel %vm952, %v1105, 0
        %1112 = vmatprep.subr.mxu0 0.0
        %1113 = vmatpush1.msra.mxu0 %v947
        %1114 = vmatprep.subr.mxu0 0.0
        %1115 = vmatpush1.msra.mxu0 %v948
        %1116 = vmatprep.subr.mxu0 0.0
        %1117 = vmatpush1.msra.mxu0 %v949
        %1118 = vmatprep.subr.mxu0 0.0
        %1119 = vmatpush1.msra.mxu0 %v950
        %1120 = vmatprep.subr.mxu0 0.0
        %1121 = vmatpush1.msra.mxu0 0.0
        %1122 = vmatprep.subr.mxu0 0.0
        %1123 = vmatpush1.msra.mxu0 0.0
        %1124 = vmatprep.subr.mxu0 0.0
        %1125 = vmatpush1.msra.mxu0 0.0
        %1126 = vmatprep.subr.mxu0 0.0
        %1127 = vmatpush1.msra.mxu0 0.0
        %1128 = vmatprep.subr.mxu0 0.0
        %1129 = vmatpush1.msra.mxu0 0.0
        %1130 = vmatprep.subr.mxu0 0.0
        %1131 = vmatpush1.msra.mxu0 0.0
        %1132 = vmatprep.subr.mxu0 0.0
        %1133 = vmatpush1.msra.mxu0 0.0
        %1134 = vmatprep.subr.mxu0 0.0
        %1135 = vmatpush1.msra.mxu0 0.0
        %1136 = vmatprep.subr.mxu0 0.0
        %1137 = vmatpush1.msra.mxu0 0.0
        %1138 = vmatprep.subr.mxu0 0.0
        %1139 = vmatpush1.msra.mxu0 0.0
        %1140 = vmatprep.subr.mxu0 0.0
        %1141 = vmatpush1.msra.mxu0 0.0
        %1142 = vmatprep.subr.mxu0 0.0
        %1143 = vmatpush1.msra.mxu0 0.0
        %1144 = vmatprep.subr.mxu0 0.0
        %1145 = vmatpush1.msra.mxu0 0.0
        %1146 = vmatprep.subr.mxu0 0.0
        %1147 = vmatpush1.msra.mxu0 0.0
        %1148 = vmatprep.subr.mxu0 0.0
        %1149 = vmatpush1.msra.mxu0 0.0
        %1150 = vmatprep.subr.mxu0 0.0
        %1151 = vmatpush1.msra.mxu0 0.0
        %1152 = vmatprep.subr.mxu0 0.0
        %1153 = vmatpush1.msra.mxu0 0.0
        %1154 = vmatprep.subr.mxu0 0.0
        %1155 = vmatpush1.msra.mxu0 0.0
        %1156 = vmatprep.subr.mxu0 0.0
        %1157 = vmatpush1.msra.mxu0 0.0
        %1158 = vmatprep.subr.mxu0 0.0
        %1159 = vmatpush1.msra.mxu0 0.0
        %1160 = vmatprep.subr.mxu0 0.0
        %1161 = vmatpush1.msra.mxu0 0.0
        %1162 = vmatprep.subr.mxu0 0.0
        %1163 = vmatpush1.msra.mxu0 0.0
        %1164 = vmatprep.subr.mxu0 0.0
        %1165 = vmatpush1.msra.mxu0 0.0
        %1166 = vmatprep.subr.mxu0 0.0
        %1167 = vmatpush1.msra.mxu0 0.0
        %1168 = vmatprep.subr.mxu0 0.0
        %1169 = vmatpush1.msra.mxu0 0.0
        %1170 = vmatprep.subr.mxu0 0.0
        %1171 = vmatpush1.msra.mxu0 0.0
        %1172 = vmatprep.subr.mxu0 0.0
        %1173 = vmatpush1.msra.mxu0 0.0
        %1174 = vmatprep.subr.mxu0 0.0
        %1175 = vmatpush1.msra.mxu0 0.0
        %1176 = vmatprep.mubr.f32.mxu0 0.0
        %1177 = vmatmul.mubr.f32.gmra.mrb[0].mxu0 %v1107
        %v1178 = vpop.f32.mrb[0].mxu0
        %v1179 = vadd.f32 0.0, %v1178
        %v1180 = vpop.f32.mrb[0].mxu0
        %1181 = vmatprep.mubr.f32.mxu0 0.0
        %1182 = vmatmul.mubr.f32.gmra.mrb[0].mxu0 %v1110
        %v1183 = vpop.f32.mrb[0].mxu0
        %v1184 = vadd.f32 0.0, %v1183
        %v1185 = vpop.f32.mrb[0].mxu0
        %1186 = vdwg.mxu0
        %vm1187 = vcmask 64512
        %v1188 = vsel %vm1187, %v1179, -inf
        %1189 = vmax.xlane.f32.xlu0 %v1188
        %v1190 = vpop.xlane.xlu0 %1189
        %v1191 = vsel %vm1187, %v1184, -inf
        %1192 = vmax.xlane.f32.xlu0 %v1191
        %v1193 = vpop.xlane.xlu0 %1192
        %v1194 = vsub.f32 %v1179, %v1190
        %v1195 = vsub.f32 %v1184, %v1193
        %v1196 = vmul.f32 %v1194, 1.442695
        %v1197 = vpow.pop %v1196
        %v1198 = vmul.f32 %v1195, 1.442695
        %v1199 = vpow.pop %v1198
        %v1200 = vsel %vm1187, %v1197, 0.0
        %1201 = vadd.xlane.f32.xlu0 %v1200
        %v1202 = vpop.xlane.xlu0 %1201
        %v1203 = vsel %vm1187, %v1199, 0.0
        %1204 = vadd.xlane.f32.xlu0 %v1203
        %v1205 = vpop.xlane.xlu0 %1204
        %v1206 = vrcp.pop %v1202
        %v1207 = vmul.f32 1.0, %v1206
        %v1208 = vrcp.pop %v1205
        %v1209 = vmul.f32 1.0, %v1208
        %v1210 = vmul.f32 %v1197, %v1207
        %v1211 = vmul.f32 %v1199, %v1209
        %s1212 = scalar_lea.vmem [#allocation6], %s951
        %1213 = vst.msk [vmem:[%s1212] sm:$0xff] %vm1187, %v1210
        %1214 = vst.msk [vmem:[%s1212 + $0x8] sm:$0xff] %vm1187, %v1211
        %1215 = vst.msk [vmem:[%s495] sm:$0xff] %vm952, %v1043
        %1216 = vst.msk [vmem:[%s495 + $0x8] sm:$0xff] %vm952, %v1045
        %1219 = vrot.lane.b32.xlu0 %v1210, 32
        %v1220 = vpop.permute.xlu0 %1219
        %1221 = vrot.lane.b32.xlu0 %v1211, 32
        %v1222 = vpop.permute.xlu0 %1221
        %vm1225 = vcmask 326912
        %1226 = vst.msk [vmem:[%s495] sm:$0xff] %vm1225, %v1220
        %1227 = vst.msk [vmem:[%s495 + $0x8] sm:$0xff] %vm1225, %v1222
        %v1228 = vld [vmem:[#allocation7] sm:$0xff]
        %1229 = vxpose.xlu0.b32.start [1/16] %v1210, 128
        %1230 = vxpose.xlu0.b32.cont [2/16] %v1211, 128
        %1231 = vxpose.xlu0.b32.cont [3/16] 0.0, 128
        %1232 = vxpose.xlu0.b32.cont [4/16] 0.0, 128
        %1233 = vxpose.xlu0.b32.cont [5/16] 0.0, 128
        %1234 = vxpose.xlu0.b32.cont [6/16] 0.0, 128
        %1235 = vxpose.xlu0.b32.cont [7/16] 0.0, 128
        %1236 = vxpose.xlu0.b32.cont [8/16] 0.0, 128
        %1237 = vxpose.xlu0.b32.cont [9/16] 0.0, 128
        %1238 = vxpose.xlu0.b32.cont [10/16] 0.0, 128
        %1239 = vxpose.xlu0.b32.cont [11/16] 0.0, 128
        %1240 = vxpose.xlu0.b32.cont [12/16] 0.0, 128
        %1241 = vxpose.xlu0.b32.cont [13/16] 0.0, 128
        %1242 = vxpose.xlu0.b32.cont [14/16] 0.0, 128
        %1243 = vxpose.xlu0.b32.cont [15/16] 0.0, 128
        %1244 = vxpose.xlu0.b32.end [16/16] 0.0, 128
        %v1245 = vpop.trf.xlu0
        %v1246 = vpop.trf.xlu0
        %v1247 = vpop.trf.xlu0
        %v1248 = vpop.trf.xlu0
        %v1249 = vpop.trf.xlu0
        %v1250 = vpop.trf.xlu0
        %v1251 = vpop.trf.xlu0
        %v1252 = vpop.trf.xlu0
        %v1253 = vpop.trf.xlu0
        %v1254 = vpop.trf.xlu0
        %v1255 = vpop.trf.xlu0
        %v1256 = vpop.trf.xlu0
        %v1257 = vpop.trf.xlu0
        %v1258 = vpop.trf.xlu0
        %v1259 = vpop.trf.xlu0
        %v1260 = vpop.trf.xlu0
        %vm1261 = vcmask 130048
        %v1263 = vsel %vm1261, %v1245, 0
        %1265 = vmatprep.subr.mxu0 0.0
        %1266 = vmatpush1.msra.mxu0 %v1043
        %1267 = vmatprep.subr.mxu0 0.0
        %1268 = vmatpush1.msra.mxu0 %v1045
        %1269 = vmatprep.subr.mxu0 0.0
        %1270 = vmatpush1.msra.mxu0 0.0
        %1271 = vmatprep.subr.mxu0 0.0
        %1272 = vmatpush1.msra.mxu0 0.0
        %1273 = vmatprep.subr.mxu0 0.0
        %1274 = vmatpush1.msra.mxu0 0.0
        %1275 = vmatprep.subr.mxu0 0.0
        %1276 = vmatpush1.msra.mxu0 0.0
        %1277 = vmatprep.subr.mxu0 0.0
        %1278 = vmatpush1.msra.mxu0 0.0
        %1279 = vmatprep.subr.mxu0 0.0
        %1280 = vmatpush1.msra.mxu0 0.0
        %1281 = vmatprep.subr.mxu0 0.0
        %1282 = vmatpush1.msra.mxu0 0.0
        %1283 = vmatprep.subr.mxu0 0.0
        %1284 = vmatpush1.msra.mxu0 0.0
        %1285 = vmatprep.subr.mxu0 0.0
        %1286 = vmatpush1.msra.mxu0 0.0
        %1287 = vmatprep.subr.mxu0 0.0
        %1288 = vmatpush1.msra.mxu0 0.0
        %1289 = vmatprep.subr.mxu0 0.0
        %1290 = vmatpush1.msra.mxu0 0.0
        %1291 = vmatprep.subr.mxu0 0.0
        %1292 = vmatpush1.msra.mxu0 0.0
        %1293 = vmatprep.subr.mxu0 0.0
        %1294 = vmatpush1.msra.mxu0 0.0
        %1295 = vmatprep.subr.mxu0 0.0
        %1296 = vmatpush1.msra.mxu0 0.0
        %1297 = vmatprep.subr.mxu0 0.0
        %1298 = vmatpush1.msra.mxu0 0.0
        %1299 = vmatprep.subr.mxu0 0.0
        %1300 = vmatpush1.msra.mxu0 0.0
        %1301 = vmatprep.subr.mxu0 0.0
        %1302 = vmatpush1.msra.mxu0 0.0
        %1303 = vmatprep.subr.mxu0 0.0
        %1304 = vmatpush1.msra.mxu0 0.0
        %1305 = vmatprep.subr.mxu0 0.0
        %1306 = vmatpush1.msra.mxu0 0.0
        %1307 = vmatprep.subr.mxu0 0.0
        %1308 = vmatpush1.msra.mxu0 0.0
        %1309 = vmatprep.subr.mxu0 0.0
        %1310 = vmatpush1.msra.mxu0 0.0
        %1311 = vmatprep.subr.mxu0 0.0
        %1312 = vmatpush1.msra.mxu0 0.0
        %1313 = vmatprep.subr.mxu0 0.0
        %1314 = vmatpush1.msra.mxu0 0.0
        %1315 = vmatprep.subr.mxu0 0.0
        %1316 = vmatpush1.msra.mxu0 0.0
        %1317 = vmatprep.subr.mxu0 0.0
        %1318 = vmatpush1.msra.mxu0 0.0
        %1319 = vmatprep.subr.mxu0 0.0
        %1320 = vmatpush1.msra.mxu0 0.0
        %1321 = vmatprep.subr.mxu0 0.0
        %1322 = vmatpush1.msra.mxu0 0.0
        %1323 = vmatprep.subr.mxu0 0.0
        %1324 = vmatpush1.msra.mxu0 0.0
        %1325 = vmatprep.subr.mxu0 0.0
        %1326 = vmatpush1.msra.mxu0 0.0
        %1327 = vmatprep.subr.mxu0 0.0
        %1328 = vmatpush1.msra.mxu0 0.0
        %1329 = vmatprep.mubr.f32.mxu0 0.0
        %1330 = vmatmul.mubr.f32.gmra.mrb[0].mxu0 %v1263
        %v1331 = vpop.f32.mrb[0].mxu0
        %v1332 = vadd.f32 0.0, %v1331
        %v1333 = vpop.f32.mrb[0].mxu0
        %1334 = vdwg.mxu0
        %v1335 = vadd.f32 %v1228, %v1332
        %1336 = vst.msk [vmem:[#allocation7] sm:$0xff] %vm952, %v1335
        %v1337 = vld [vmem:[#allocation8] sm:$0xff]
        %1338 = vmatprep.subr.mxu0 0.0
        %1339 = vmatpush1.msra.mxu0 %v941
        %1340 = vmatprep.subr.mxu0 0.0
        %1341 = vmatpush1.msra.mxu0 %v942
        %1342 = vmatprep.subr.mxu0 0.0
        %1343 = vmatpush1.msra.mxu0 0.0
        %1344 = vmatprep.subr.mxu0 0.0
        %1345 = vmatpush1.msra.mxu0 0.0
        %1346 = vmatprep.subr.mxu0 0.0
        %1347 = vmatpush1.msra.mxu0 0.0
        %1348 = vmatprep.subr.mxu0 0.0
        %1349 = vmatpush1.msra.mxu0 0.0
        %1350 = vmatprep.subr.mxu0 0.0
        %1351 = vmatpush1.msra.mxu0 0.0
        %1352 = vmatprep.subr.mxu0 0.0
        %1353 = vmatpush1.msra.mxu0 0.0
        %1354 = vmatprep.subr.mxu0 0.0
        %1355 = vmatpush1.msra.mxu0 0.0
        %1356 = vmatprep.subr.mxu0 0.0
        %1357 = vmatpush1.msra.mxu0 0.0
        %1358 = vmatprep.subr.mxu0 0.0
        %1359 = vmatpush1.msra.mxu0 0.0
        %1360 = vmatprep.subr.mxu0 0.0
        %1361 = vmatpush1.msra.mxu0 0.0
        %1362 = vmatprep.subr.mxu0 0.0
        %1363 = vmatpush1.msra.mxu0 0.0
        %1364 = vmatprep.subr.mxu0 0.0
        %1365 = vmatpush1.msra.mxu0 0.0
        %1366 = vmatprep.subr.mxu0 0.0
        %1367 = vmatpush1.msra.mxu0 0.0
        %1368 = vmatprep.subr.mxu0 0.0
        %1369 = vmatpush1.msra.mxu0 0.0
        %1370 = vmatprep.subr.mxu0 0.0
        %1371 = vmatpush1.msra.mxu0 0.0
        %1372 = vmatprep.subr.mxu0 0.0
        %1373 = vmatpush1.msra.mxu0 0.0
        %1374 = vmatprep.subr.mxu0 0.0
        %1375 = vmatpush1.msra.mxu0 0.0
        %1376 = vmatprep.subr.mxu0 0.0
        %1377 = vmatpush1.msra.mxu0 0.0
        %1378 = vmatprep.subr.mxu0 0.0
        %1379 = vmatpush1.msra.mxu0 0.0
        %1380 = vmatprep.subr.mxu0 0.0
        %1381 = vmatpush1.msra.mxu0 0.0
        %1382 = vmatprep.subr.mxu0 0.0
        %1383 = vmatpush1.msra.mxu0 0.0
        %1384 = vmatprep.subr.mxu0 0.0
        %1385 = vmatpush1.msra.mxu0 0.0
        %1386 = vmatprep.subr.mxu0 0.0
        %1387 = vmatpush1.msra.mxu0 0.0
        %1388 = vmatprep.subr.mxu0 0.0
        %1389 = vmatpush1.msra.mxu0 0.0
        %1390 = vmatprep.subr.mxu0 0.0
        %1391 = vmatpush1.msra.mxu0 0.0
        %1392 = vmatprep.subr.mxu0 0.0
        %1393 = vmatpush1.msra.mxu0 0.0
        %1394 = vmatprep.subr.mxu0 0.0
        %1395 = vmatpush1.msra.mxu0 0.0
        %1396 = vmatprep.subr.mxu0 0.0
        %1397 = vmatpush1.msra.mxu0 0.0
        %1398 = vmatprep.subr.mxu0 0.0
        %1399 = vmatpush1.msra.mxu0 0.0
        %1400 = vmatprep.subr.mxu0 0.0
        %1401 = vmatpush1.msra.mxu0 0.0
        %1402 = vmatprep.mubr.f32.mxu0 0.0
        %1403 = vmatmul.mubr.f32.gmra.mrb[0].mxu0 %v1263
        %v1404 = vpop.f32.mrb[0].mxu0
        %v1405 = vadd.f32 0.0, %v1404
        %v1406 = vpop.f32.mrb[0].mxu0
        %1407 = vdwg.mxu0
        %v1408 = vadd.f32 %v1337, %v1405
        %1409 = vst.msk [vmem:[#allocation8] sm:$0xff] %vm952, %v1408
        %p1410 = scmp.eq.s32.totalorder %s30, 1
        // Predicated region
        $region85: #{ass_forward.1} parent=71 // pred_check
          %p1411 = pneg %p1410
        $region86: #{ass_forward.1} parent=71 // pred_check_branch
          %1413 = sbr.rel (%p1411) target = $region88
        $region87: #{ass_forward.1} parent=71 // pred_region
          %v1414 = vld [vmem:[#allocation7] sm:$0xff]
          %v1415 = vld [vmem:[#allocation8] sm:$0xff]
          %v1416 = vld [vmem:[#allocation6] sm:$0xff]
          %v1417 = vld [vmem:[#allocation6 + $0x8] sm:$0xff]
          %v1418 = vld [vmem:[#allocation6 + $0x10] sm:$0xff]
          %v1419 = vld [vmem:[#allocation6 + $0x18] sm:$0xff]
          %v1421 = vsel %vm952, %v1415, 0
          %1423 = vmatprep.subr.mxu0 0.0
          %1424 = vmatpush1.msra.mxu0 %v1416
          %1425 = vmatprep.subr.mxu0 0.0
          %1426 = vmatpush1.msra.mxu0 %v1417
          %1427 = vmatprep.subr.mxu0 0.0
          %1428 = vmatpush1.msra.mxu0 %v1418
          %1429 = vmatprep.subr.mxu0 0.0
          %1430 = vmatpush1.msra.mxu0 %v1419
          %1431 = vmatprep.subr.mxu0 0.0
          %1432 = vmatpush1.msra.mxu0 0.0
          %1433 = vmatprep.subr.mxu0 0.0
          %1434 = vmatpush1.msra.mxu0 0.0
          %1435 = vmatprep.subr.mxu0 0.0
          %1436 = vmatpush1.msra.mxu0 0.0
          %1437 = vmatprep.subr.mxu0 0.0
          %1438 = vmatpush1.msra.mxu0 0.0
          %1439 = vmatprep.subr.mxu0 0.0
          %1440 = vmatpush1.msra.mxu0 0.0
          %1441 = vmatprep.subr.mxu0 0.0
          %1442 = vmatpush1.msra.mxu0 0.0
          %1443 = vmatprep.subr.mxu0 0.0
          %1444 = vmatpush1.msra.mxu0 0.0
          %1445 = vmatprep.subr.mxu0 0.0
          %1446 = vmatpush1.msra.mxu0 0.0
          %1447 = vmatprep.subr.mxu0 0.0
          %1448 = vmatpush1.msra.mxu0 0.0
          %1449 = vmatprep.subr.mxu0 0.0
          %1450 = vmatpush1.msra.mxu0 0.0
          %1451 = vmatprep.subr.mxu0 0.0
          %1452 = vmatpush1.msra.mxu0 0.0
          %1453 = vmatprep.subr.mxu0 0.0
          %1454 = vmatpush1.msra.mxu0 0.0
          %1455 = vmatprep.subr.mxu0 0.0
          %1456 = vmatpush1.msra.mxu0 0.0
          %1457 = vmatprep.subr.mxu0 0.0
          %1458 = vmatpush1.msra.mxu0 0.0
          %1459 = vmatprep.subr.mxu0 0.0
          %1460 = vmatpush1.msra.mxu0 0.0
          %1461 = vmatprep.subr.mxu0 0.0
          %1462 = vmatpush1.msra.mxu0 0.0
          %1463 = vmatprep.subr.mxu0 0.0
          %1464 = vmatpush1.msra.mxu0 0.0
          %1465 = vmatprep.subr.mxu0 0.0
          %1466 = vmatpush1.msra.mxu0 0.0
          %1467 = vmatprep.subr.mxu0 0.0
          %1468 = vmatpush1.msra.mxu0 0.0
          %1469 = vmatprep.subr.mxu0 0.0
          %1470 = vmatpush1.msra.mxu0 0.0
          %1471 = vmatprep.subr.mxu0 0.0
          %1472 = vmatpush1.msra.mxu0 0.0
          %1473 = vmatprep.subr.mxu0 0.0
          %1474 = vmatpush1.msra.mxu0 0.0
          %1475 = vmatprep.subr.mxu0 0.0
          %1476 = vmatpush1.msra.mxu0 0.0
          %1477 = vmatprep.subr.mxu0 0.0
          %1478 = vmatpush1.msra.mxu0 0.0
          %1479 = vmatprep.subr.mxu0 0.0
          %1480 = vmatpush1.msra.mxu0 0.0
          %1481 = vmatprep.subr.mxu0 0.0
          %1482 = vmatpush1.msra.mxu0 0.0
          %1483 = vmatprep.subr.mxu0 0.0
          %1484 = vmatpush1.msra.mxu0 0.0
          %1485 = vmatprep.subr.mxu0 0.0
          %1486 = vmatpush1.msra.mxu0 0.0
          %1487 = vmatprep.mubr.f32.mxu0 0.0
          %1488 = vmatmul.mubr.f32.gmra.mrb[0].mxu0 %v1421
          %v1489 = vpop.f32.mrb[0].mxu0
          %v1490 = vadd.f32 0.0, %v1489
          %v1491 = vpop.f32.mrb[0].mxu0
          %1492 = vdwg.mxu0
          %v1493 = vld [vmem:[%s9] sm:$0xff]
          %v1494 = vld [vmem:[%s9 + $0x8] sm:$0xff]
          %v1495 = vld [vmem:[%s9 + $0x10] sm:$0xff]
          %v1496 = vld [vmem:[%s9 + $0x18] sm:$0xff]
          %v1497 = vld [vmem:[%s10] sm:$0x1]
          %v1499 = vlaneseq
          %v1500 = vshrl.u32 %v1499, 7
          %v1501 = vsub.s32 0, %v1500
          %v1502 = vrot.slane %v1497, %v1501
          %v1505 = vsel %vm952, %v1414, 0
          %1507 = vmatprep.subr.mxu0 0.0
          %1508 = vmatpush1.msra.mxu0 %v1493
          %1509 = vmatprep.subr.mxu0 0.0
          %1510 = vmatpush1.msra.mxu0 %v1494
          %1511 = vmatprep.subr.mxu0 0.0
          %1512 = vmatpush1.msra.mxu0 %v1495
          %1513 = vmatprep.subr.mxu0 0.0
          %1514 = vmatpush1.msra.mxu0 %v1496
          %1515 = vmatprep.subr.mxu0 0.0
          %1516 = vmatpush1.msra.mxu0 0.0
          %1517 = vmatprep.subr.mxu0 0.0
          %1518 = vmatpush1.msra.mxu0 0.0
          %1519 = vmatprep.subr.mxu0 0.0
          %1520 = vmatpush1.msra.mxu0 0.0
          %1521 = vmatprep.subr.mxu0 0.0
          %1522 = vmatpush1.msra.mxu0 0.0
          %1523 = vmatprep.subr.mxu0 0.0
          %1524 = vmatpush1.msra.mxu0 0.0
          %1525 = vmatprep.subr.mxu0 0.0
          %1526 = vmatpush1.msra.mxu0 0.0
          %1527 = vmatprep.subr.mxu0 0.0
          %1528 = vmatpush1.msra.mxu0 0.0
          %1529 = vmatprep.subr.mxu0 0.0
          %1530 = vmatpush1.msra.mxu0 0.0
          %1531 = vmatprep.subr.mxu0 0.0
          %1532 = vmatpush1.msra.mxu0 0.0
          %1533 = vmatprep.subr.mxu0 0.0
          %1534 = vmatpush1.msra.mxu0 0.0
          %1535 = vmatprep.subr.mxu0 0.0
          %1536 = vmatpush1.msra.mxu0 0.0
          %1537 = vmatprep.subr.mxu0 0.0
          %1538 = vmatpush1.msra.mxu0 0.0
          %1539 = vmatprep.subr.mxu0 0.0
          %1540 = vmatpush1.msra.mxu0 0.0
          %1541 = vmatprep.subr.mxu0 0.0
          %1542 = vmatpush1.msra.mxu0 0.0
          %1543 = vmatprep.subr.mxu0 0.0
          %1544 = vmatpush1.msra.mxu0 0.0
          %1545 = vmatprep.subr.mxu0 0.0
          %1546 = vmatpush1.msra.mxu0 0.0
          %1547 = vmatprep.subr.mxu0 0.0
          %1548 = vmatpush1.msra.mxu0 0.0
          %1549 = vmatprep.subr.mxu0 0.0
          %1550 = vmatpush1.msra.mxu0 0.0
          %1551 = vmatprep.subr.mxu0 0.0
          %1552 = vmatpush1.msra.mxu0 0.0
          %1553 = vmatprep.subr.mxu0 0.0
          %1554 = vmatpush1.msra.mxu0 0.0
          %1555 = vmatprep.subr.mxu0 0.0
          %1556 = vmatpush1.msra.mxu0 0.0
          %1557 = vmatprep.subr.mxu0 0.0
          %1558 = vmatpush1.msra.mxu0 0.0
          %1559 = vmatprep.subr.mxu0 0.0
          %1560 = vmatpush1.msra.mxu0 0.0
          %1561 = vmatprep.subr.mxu0 0.0
          %1562 = vmatpush1.msra.mxu0 0.0
          %1563 = vmatprep.subr.mxu0 0.0
          %1564 = vmatpush1.msra.mxu0 0.0
          %1565 = vmatprep.subr.mxu0 0.0
          %1566 = vmatpush1.msra.mxu0 0.0
          %1567 = vmatprep.subr.mxu0 0.0
          %1568 = vmatpush1.msra.mxu0 0.0
          %1569 = vmatprep.subr.mxu0 0.0
          %1570 = vmatpush1.msra.mxu0 0.0
          %1571 = vmatprep.mubr.f32.mxu0 0.0
          %1572 = vmatmul.mubr.f32.gmra.mrb[0].mxu0 %v1505
          %v1573 = vpop.f32.mrb[0].mxu0
          %v1574 = vadd.f32 %v1502, %v1573
          %v1575 = vpop.f32.mrb[0].mxu0
          %1576 = vdwg.mxu0
          %v1577 = vld [vmem:[%s11] sm:$0xff]
          %v1578 = vld [vmem:[%s11 + $0x8] sm:$0xff]
          %v1579 = vld [vmem:[%s11 + $0x10] sm:$0xff]
          %v1580 = vld [vmem:[%s11 + $0x18] sm:$0xff]
          %v1581 = vld [vmem:[%s12] sm:$0x1]
          %v1583 = vlaneseq
          %v1584 = vshrl.u32 %v1583, 7
          %v1585 = vsub.s32 0, %v1584
          %v1586 = vrot.slane %v1581, %v1585
          %v1589 = vsel %vm952, %v1574, 0
          %1591 = vmatprep.subr.mxu0 0.0
          %1592 = vmatpush1.msra.mxu0 %v1577
          %1593 = vmatprep.subr.mxu0 0.0
          %1594 = vmatpush1.msra.mxu0 %v1578
          %1595 = vmatprep.subr.mxu0 0.0
          %1596 = vmatpush1.msra.mxu0 %v1579
          %1597 = vmatprep.subr.mxu0 0.0
          %1598 = vmatpush1.msra.mxu0 %v1580
          %1599 = vmatprep.subr.mxu0 0.0
          %1600 = vmatpush1.msra.mxu0 0.0
          %1601 = vmatprep.subr.mxu0 0.0
          %1602 = vmatpush1.msra.mxu0 0.0
          %1603 = vmatprep.subr.mxu0 0.0
          %1604 = vmatpush1.msra.mxu0 0.0
          %1605 = vmatprep.subr.mxu0 0.0
          %1606 = vmatpush1.msra.mxu0 0.0
          %1607 = vmatprep.subr.mxu0 0.0
          %1608 = vmatpush1.msra.mxu0 0.0
          %1609 = vmatprep.subr.mxu0 0.0
          %1610 = vmatpush1.msra.mxu0 0.0
          %1611 = vmatprep.subr.mxu0 0.0
          %1612 = vmatpush1.msra.mxu0 0.0
          %1613 = vmatprep.subr.mxu0 0.0
          %1614 = vmatpush1.msra.mxu0 0.0
          %1615 = vmatprep.subr.mxu0 0.0
          %1616 = vmatpush1.msra.mxu0 0.0
          %1617 = vmatprep.subr.mxu0 0.0
          %1618 = vmatpush1.msra.mxu0 0.0
          %1619 = vmatprep.subr.mxu0 0.0
          %1620 = vmatpush1.msra.mxu0 0.0
          %1621 = vmatprep.subr.mxu0 0.0
          %1622 = vmatpush1.msra.mxu0 0.0
          %1623 = vmatprep.subr.mxu0 0.0
          %1624 = vmatpush1.msra.mxu0 0.0
          %1625 = vmatprep.subr.mxu0 0.0
          %1626 = vmatpush1.msra.mxu0 0.0
          %1627 = vmatprep.subr.mxu0 0.0
          %1628 = vmatpush1.msra.mxu0 0.0
          %1629 = vmatprep.subr.mxu0 0.0
          %1630 = vmatpush1.msra.mxu0 0.0
          %1631 = vmatprep.subr.mxu0 0.0
          %1632 = vmatpush1.msra.mxu0 0.0
          %1633 = vmatprep.subr.mxu0 0.0
          %1634 = vmatpush1.msra.mxu0 0.0
          %1635 = vmatprep.subr.mxu0 0.0
          %1636 = vmatpush1.msra.mxu0 0.0
          %1637 = vmatprep.subr.mxu0 0.0
          %1638 = vmatpush1.msra.mxu0 0.0
          %1639 = vmatprep.subr.mxu0 0.0
          %1640 = vmatpush1.msra.mxu0 0.0
          %1641 = vmatprep.subr.mxu0 0.0
          %1642 = vmatpush1.msra.mxu0 0.0
          %1643 = vmatprep.subr.mxu0 0.0
          %1644 = vmatpush1.msra.mxu0 0.0
          %1645 = vmatprep.subr.mxu0 0.0
          %1646 = vmatpush1.msra.mxu0 0.0
          %1647 = vmatprep.subr.mxu0 0.0
          %1648 = vmatpush1.msra.mxu0 0.0
          %1649 = vmatprep.subr.mxu0 0.0
          %1650 = vmatpush1.msra.mxu0 0.0
          %1651 = vmatprep.subr.mxu0 0.0
          %1652 = vmatpush1.msra.mxu0 0.0
          %1653 = vmatprep.subr.mxu0 0.0
          %1654 = vmatpush1.msra.mxu0 0.0
          %1655 = vmatprep.mubr.f32.mxu0 0.0
          %1656 = vmatmul.mubr.f32.gmra.mrb[0].mxu0 %v1589
          %v1657 = vpop.f32.mrb[0].mxu0
          %v1658 = vadd.f32 %v1586, %v1657
          %v1659 = vpop.f32.mrb[0].mxu0
          %1660 = vdwg.mxu0
          %v1662 = vsel %vm952, %v1658, 0
          %1664 = vmatprep.subr.mxu0 0.0
          %1665 = vmatpush1.xpose.msra.mxu0 %v1662
          %1666 = vmatprep.subr.mxu0 0.0
          %1667 = vmatpush1.xpose.msra.mxu0 0.0
          %1668 = vmatprep.subr.mxu0 0.0
          %1669 = vmatpush1.xpose.msra.mxu0 0.0
          %1670 = vmatprep.subr.mxu0 0.0
          %1671 = vmatpush1.xpose.msra.mxu0 0.0
          %1672 = vmatprep.subr.mxu0 0.0
          %1673 = vmatpush1.xpose.msra.mxu0 0.0
          %1674 = vmatprep.subr.mxu0 0.0
          %1675 = vmatpush1.xpose.msra.mxu0 0.0
          %1676 = vmatprep.subr.mxu0 0.0
          %1677 = vmatpush1.xpose.msra.mxu0 0.0
          %1678 = vmatprep.subr.mxu0 0.0
          %1679 = vmatpush1.xpose.msra.mxu0 0.0
          %1680 = vmatprep.subr.mxu0 0.0
          %1681 = vmatpush1.xpose.msra.mxu0 0.0
          %1682 = vmatprep.subr.mxu0 0.0
          %1683 = vmatpush1.xpose.msra.mxu0 0.0
          %1684 = vmatprep.subr.mxu0 0.0
          %1685 = vmatpush1.xpose.msra.mxu0 0.0
          %1686 = vmatprep.subr.mxu0 0.0
          %1687 = vmatpush1.xpose.msra.mxu0 0.0
          %1688 = vmatprep.subr.mxu0 0.0
          %1689 = vmatpush1.xpose.msra.mxu0 0.0
          %1690 = vmatprep.subr.mxu0 0.0
          %1691 = vmatpush1.xpose.msra.mxu0 0.0
          %1692 = vmatprep.subr.mxu0 0.0
          %1693 = vmatpush1.xpose.msra.mxu0 0.0
          %1694 = vmatprep.subr.mxu0 0.0
          %1695 = vmatpush1.xpose.msra.mxu0 0.0
          %1696 = vmatprep.subr.mxu0 0.0
          %1697 = vmatpush1.xpose.msra.mxu0 0.0
          %1698 = vmatprep.subr.mxu0 0.0
          %1699 = vmatpush1.xpose.msra.mxu0 0.0
          %1700 = vmatprep.subr.mxu0 0.0
          %1701 = vmatpush1.xpose.msra.mxu0 0.0
          %1702 = vmatprep.subr.mxu0 0.0
          %1703 = vmatpush1.xpose.msra.mxu0 0.0
          %1704 = vmatprep.subr.mxu0 0.0
          %1705 = vmatpush1.xpose.msra.mxu0 0.0
          %1706 = vmatprep.subr.mxu0 0.0
          %1707 = vmatpush1.xpose.msra.mxu0 0.0
          %1708 = vmatprep.subr.mxu0 0.0
          %1709 = vmatpush1.xpose.msra.mxu0 0.0
          %1710 = vmatprep.subr.mxu0 0.0
          %1711 = vmatpush1.xpose.msra.mxu0 0.0
          %1712 = vmatprep.subr.mxu0 0.0
          %1713 = vmatpush1.xpose.msra.mxu0 0.0
          %1714 = vmatprep.subr.mxu0 0.0
          %1715 = vmatpush1.xpose.msra.mxu0 0.0
          %1716 = vmatprep.subr.mxu0 0.0
          %1717 = vmatpush1.xpose.msra.mxu0 0.0
          %1718 = vmatprep.subr.mxu0 0.0
          %1719 = vmatpush1.xpose.msra.mxu0 0.0
          %1720 = vmatprep.subr.mxu0 0.0
          %1721 = vmatpush1.xpose.msra.mxu0 0.0
          %1722 = vmatprep.subr.mxu0 0.0
          %1723 = vmatpush1.xpose.msra.mxu0 0.0
          %1724 = vmatprep.subr.mxu0 0.0
          %1725 = vmatpush1.xpose.msra.mxu0 0.0
          %1726 = vmatprep.subr.mxu0 0.0
          %1727 = vmatpush1.xpose.msra.mxu0 0.0
          %1728 = vmatprep.mubr.f32.mxu0 0.0
          %1729 = vmatmul.mubr.f32.gmra.mrb[0].mxu0 %v1662
          %v1730 = vpop.f32.mrb[0].mxu0
          %v1731 = vadd.f32 0.0, %v1730
          %v1732 = vpop.f32.mrb[0].mxu0
          %1733 = vdwg.mxu0
          %v1734 = vlaneseq
          %v1735 = vshrl.u32 %v1734, 7
          %v1736 = vlaneseq
          %v1737 = vand.u32 %v1736, 127
          %vm1738 = vcmp.eq.s32.totalorder %v1735, %v1737
          %v1739 = vsel %vm1738, 1, 0
          %v1740 = vcvt.s32.f32 %v1739
          %v1741 = vmul.f32 %v1658, %v1658
          %v1742 = vsel %vm952, %v1741, 0.0
          %1743 = vadd.xlane.f32.xlu0 %v1742
          %v1744 = vpop.xlane.xlu0 %1743
          %v1745 = vmul.f32 %v1731, %v1740
          %v1746 = vsel %vm1187, %v1745, 0.0
          %v1747 = vrot.slane %v1746, 4
          %v1748 = vadd.f32 %v1746, %v1747
          %v1749 = vrot.slane %v1748, 2
          %v1750 = vadd.f32 %v1748, %v1749
          %v1751 = vrot.slane %v1750, 1
          %v1752 = vadd.f32 %v1750, %v1751
          %v1753 = vadd.f32 %v1744, %v1752
          %v1754 = vmul.f32 %v1731, 2.0
          %v1755 = vsub.f32 %v1753, %v1754
          %v1756 = vcvt.s32.f32 %v1737
          %v1757 = vsel %vm1187, %v1755, inf
          %1758 = vmin.xlane.f32.xlu0 %v1757
          %v1759 = vpop.xlane.xlu0 %1758
          %vm1760 = vcmp.le.f32.partialorder %v1755, %v1759
          %v1761 = vsel %vm1760, %v1756, 8.0
          %v1762 = vsel %vm1187, %v1761, inf
          %1763 = vmin.xlane.f32.xlu0 %v1762
          %v1764 = vpop.xlane.xlu0 %1763
          %vm1765 = vcmp.eq.f32.partialorder %v1756, %v1764
          %vm1766 = vmand %vm1760, %vm1765
          %v1767 = vsel %vm1766, 1, 0
          %v1768 = vcvt.s32.f32 %v1767
          %v1769 = vadd.f32 %v1768, 0.0
          %vm1770 = vcmp.gt.f32.partialorder %v1768, 0.0
          %v1771 = vsel %vm1770, 3e+38, %v1755
          %v1772 = vsel %vm1187, %v1771, inf
          %1773 = vmin.xlane.f32.xlu0 %v1772
          %v1774 = vpop.xlane.xlu0 %1773
          %vm1775 = vcmp.le.f32.partialorder %v1771, %v1774
          %v1776 = vsel %vm1775, %v1756, 8.0
          %v1777 = vsel %vm1187, %v1776, inf
          %1778 = vmin.xlane.f32.xlu0 %v1777
          %v1779 = vpop.xlane.xlu0 %1778
          %vm1780 = vcmp.eq.f32.partialorder %v1756, %v1779
          %vm1781 = vmand %vm1775, %vm1780
          %v1782 = vsel %vm1781, 1, 0
          %v1783 = vcvt.s32.f32 %v1782
          %v1784 = vadd.f32 %v1769, %v1783
          %vm1785 = vcmp.gt.f32.partialorder %v1783, 0.0
          %v1786 = vsel %vm1785, 3e+38, %v1771
          %v1787 = vsel %vm1187, %v1786, inf
          %1788 = vmin.xlane.f32.xlu0 %v1787
          %v1789 = vpop.xlane.xlu0 %1788
          %vm1790 = vcmp.le.f32.partialorder %v1786, %v1789
          %v1791 = vsel %vm1790, %v1756, 8.0
          %v1792 = vsel %vm1187, %v1791, inf
          %1793 = vmin.xlane.f32.xlu0 %v1792
          %v1794 = vpop.xlane.xlu0 %1793
          %vm1795 = vcmp.eq.f32.partialorder %v1756, %v1794
          %vm1796 = vmand %vm1790, %vm1795
          %v1797 = vsel %vm1796, 1, 0
          %v1798 = vcvt.s32.f32 %v1797
          %v1799 = vadd.f32 %v1784, %v1798
          %1800 = vxpose.xlu0.b32.start [1/16] %v1799, 128
          %1801 = vxpose.xlu0.b32.cont [2/16] 0.0, 128
          %1802 = vxpose.xlu0.b32.cont [3/16] 0.0, 128
          %1803 = vxpose.xlu0.b32.cont [4/16] 0.0, 128
          %1804 = vxpose.xlu0.b32.cont [5/16] 0.0, 128
          %1805 = vxpose.xlu0.b32.cont [6/16] 0.0, 128
          %1806 = vxpose.xlu0.b32.cont [7/16] 0.0, 128
          %1807 = vxpose.xlu0.b32.cont [8/16] 0.0, 128
          %1808 = vxpose.xlu0.b32.cont [9/16] 0.0, 128
          %1809 = vxpose.xlu0.b32.cont [10/16] 0.0, 128
          %1810 = vxpose.xlu0.b32.cont [11/16] 0.0, 128
          %1811 = vxpose.xlu0.b32.cont [12/16] 0.0, 128
          %1812 = vxpose.xlu0.b32.cont [13/16] 0.0, 128
          %1813 = vxpose.xlu0.b32.cont [14/16] 0.0, 128
          %1814 = vxpose.xlu0.b32.cont [15/16] 0.0, 128
          %1815 = vxpose.xlu0.b32.end [16/16] 0.0, 128
          %v1816 = vpop.trf.xlu0
          %v1817 = vpop.trf.xlu0
          %v1818 = vpop.trf.xlu0
          %v1819 = vpop.trf.xlu0
          %v1820 = vpop.trf.xlu0
          %v1821 = vpop.trf.xlu0
          %v1822 = vpop.trf.xlu0
          %v1823 = vpop.trf.xlu0
          %v1824 = vpop.trf.xlu0
          %v1825 = vpop.trf.xlu0
          %v1826 = vpop.trf.xlu0
          %v1827 = vpop.trf.xlu0
          %v1828 = vpop.trf.xlu0
          %v1829 = vpop.trf.xlu0
          %v1830 = vpop.trf.xlu0
          %v1831 = vpop.trf.xlu0
          %v1833 = vsel %vm1187, %v1816, 0
          %1835 = vmatprep.subr.mxu0 0.0
          %1836 = vmatpush1.msra.mxu0 %v1740
          %1837 = vmatprep.subr.mxu0 0.0
          %1838 = vmatpush1.msra.mxu0 0.0
          %1839 = vmatprep.subr.mxu0 0.0
          %1840 = vmatpush1.msra.mxu0 0.0
          %1841 = vmatprep.subr.mxu0 0.0
          %1842 = vmatpush1.msra.mxu0 0.0
          %1843 = vmatprep.subr.mxu0 0.0
          %1844 = vmatpush1.msra.mxu0 0.0
          %1845 = vmatprep.subr.mxu0 0.0
          %1846 = vmatpush1.msra.mxu0 0.0
          %1847 = vmatprep.subr.mxu0 0.0
          %1848 = vmatpush1.msra.mxu0 0.0
          %1849 = vmatprep.subr.mxu0 0.0
          %1850 = vmatpush1.msra.mxu0 0.0
          %1851 = vmatprep.subr.mxu0 0.0
          %1852 = vmatpush1.msra.mxu0 0.0
          %1853 = vmatprep.subr.mxu0 0.0
          %1854 = vmatpush1.msra.mxu0 0.0
          %1855 = vmatprep.subr.mxu0 0.0
          %1856 = vmatpush1.msra.mxu0 0.0
          %1857 = vmatprep.subr.mxu0 0.0
          %1858 = vmatpush1.msra.mxu0 0.0
          %1859 = vmatprep.subr.mxu0 0.0
          %1860 = vmatpush1.msra.mxu0 0.0
          %1861 = vmatprep.subr.mxu0 0.0
          %1862 = vmatpush1.msra.mxu0 0.0
          %1863 = vmatprep.subr.mxu0 0.0
          %1864 = vmatpush1.msra.mxu0 0.0
          %1865 = vmatprep.subr.mxu0 0.0
          %1866 = vmatpush1.msra.mxu0 0.0
          %1867 = vmatprep.subr.mxu0 0.0
          %1868 = vmatpush1.msra.mxu0 0.0
          %1869 = vmatprep.subr.mxu0 0.0
          %1870 = vmatpush1.msra.mxu0 0.0
          %1871 = vmatprep.subr.mxu0 0.0
          %1872 = vmatpush1.msra.mxu0 0.0
          %1873 = vmatprep.subr.mxu0 0.0
          %1874 = vmatpush1.msra.mxu0 0.0
          %1875 = vmatprep.subr.mxu0 0.0
          %1876 = vmatpush1.msra.mxu0 0.0
          %1877 = vmatprep.subr.mxu0 0.0
          %1878 = vmatpush1.msra.mxu0 0.0
          %1879 = vmatprep.subr.mxu0 0.0
          %1880 = vmatpush1.msra.mxu0 0.0
          %1881 = vmatprep.subr.mxu0 0.0
          %1882 = vmatpush1.msra.mxu0 0.0
          %1883 = vmatprep.subr.mxu0 0.0
          %1884 = vmatpush1.msra.mxu0 0.0
          %1885 = vmatprep.subr.mxu0 0.0
          %1886 = vmatpush1.msra.mxu0 0.0
          %1887 = vmatprep.subr.mxu0 0.0
          %1888 = vmatpush1.msra.mxu0 0.0
          %1889 = vmatprep.subr.mxu0 0.0
          %1890 = vmatpush1.msra.mxu0 0.0
          %1891 = vmatprep.subr.mxu0 0.0
          %1892 = vmatpush1.msra.mxu0 0.0
          %1893 = vmatprep.subr.mxu0 0.0
          %1894 = vmatpush1.msra.mxu0 0.0
          %1895 = vmatprep.subr.mxu0 0.0
          %1896 = vmatpush1.msra.mxu0 0.0
          %1897 = vmatprep.subr.mxu0 0.0
          %1898 = vmatpush1.msra.mxu0 0.0
          %1899 = vmatprep.mubr.f32.mxu0 0.0
          %1900 = vmatmul.mubr.f32.gmra.mrb[0].mxu0 %v1833
          %v1901 = vpop.f32.mrb[0].mxu0
          %v1902 = vadd.f32 0.0, %v1901
          %v1903 = vpop.f32.mrb[0].mxu0
          %1904 = vdwg.mxu0
          %v1905 = vadd.f32 %v1799, %v1902
          %v1906 = vmul.f32 %v1905, 0.5
          %1907 = vst.msk [vmem:[%s14] sm:$0xff] %vm952, %v1414
          %1909 = vrot.lane.b32.xlu0 %v1490, 32
          %v1910 = vpop.permute.xlu0 %1909
          %1912 = vst.msk [vmem:[%s14] sm:$0xff] %vm1225, %v1910
          %1914 = vrot.lane.b32.xlu0 %v1906, 40
          %v1915 = vpop.permute.xlu0 %1914
          %vm1917 = vcmask 392512
          %1918 = vst.msk [vmem:[%s14] sm:$0xff] %vm1917, %v1915
        $region88: #{ass_forward.1} parent=71 // pred_fallthru
          _
        %s1919 = smul.u32 2, %s30
        %p1920 = scmp.lt.s32.totalorder %s1919, 3
        %s1921 = scalar_select %p1920, %s1919, 3
        %s1922 = smul.addr %s1921, 8
        %s1923 = scalar_lea.vmem %s13, %s1922
        // Predicated region
        $region89: #{ass_forward.1} parent=71 // pred_check
          %p1924 = pneg %p326
        $region90: #{ass_forward.1} parent=71 // pred_check_branch
          %1926 = sbr.rel (%p1924) target = $region92
        $region91: #{ass_forward.1} parent=71 // pred_region
          %s1927 = smul.u32 2, %s30
        $region92: #{ass_forward.1} parent=71 // pred_fallthru
          _
        // Predicated region
        $region93: #{ass_forward.1} parent=71 // pred_check
          %p1928 = pneg %p347
        $region94: #{ass_forward.1} parent=71 // pred_check_branch
          %1930 = sbr.rel (%p1928) target = $region96
        $region95: #{ass_forward.1} parent=71 // pred_region
          _
        $region96: #{ass_forward.1} parent=71 // pred_fallthru
          _
        // Predicated region
        $region97: #{ass_forward.1} parent=71 // pred_check
          %p1931 = pneg %p347
        $region98: #{ass_forward.1} parent=71 // pred_check_branch
          %1933 = sbr.rel (%p1931) target = $region100
        $region99: #{ass_forward.1} parent=71 // pred_region
          _
        $region100: #{ass_forward.1} parent=71 // pred_fallthru
          _
      $region72: #{ass_forward.1} parent=5 // pred_fallthru
        _
      %p1934 = scmp.le.s32.totalorder 2, %s25
      // Predicated region
      $region101: #{ass_forward.1} parent=5 // pred_check
        %p1935 = pneg %p1934
      $region102: #{ass_forward.1} parent=5 // pred_check_branch
        %1937 = sbr.rel (%p1935) target = $region104
      $region103: #{ass_forward.1} parent=5 // pred_region
        %s1938 = ssub.s32 %s25, 2
        // Predicated region
        $region105: #{ass_forward.1} parent=103 // pred_check
          %p1939 = pneg %p332
        $region106: #{ass_forward.1} parent=103 // pred_check_branch
          %1941 = sbr.rel (%p1939) target = $region108
        $region107: #{ass_forward.1} parent=103 // pred_region
          %s1942 = smul.u32 2, %s31
          %p1943 = scmp.lt.s32.totalorder %s1942, 3
          %s1944 = scalar_select %p1943, %s1942, 3
          %s1945 = smul.addr %s1944, 8
          %s1946 = scalar_lea.vmem %s13, %s1945
        $region108: #{ass_forward.1} parent=103 // pred_fallthru
          _
      $region104: #{ass_forward.1} parent=5 // pred_fallthru
        _
    $region6: #{ass_forward.1} parent=1 // loop_footer
      %s29 = sadd.s32 1, %s25
    $region7: #{ass_forward.1} parent=1 // loop_footer_branch
      %24 = sbr.rel target = $region3
    $region8: #{ass_forward.1} parent=1 // loop_exit
      _
    %1947 = vsyncpa [#allocation11], 1
    %s1948 = scalar_lea.sflag [#allocation11], 1
    %1949 = vsyncpa %s1948, 1
    %1950 = vsyncpa [#allocation13], 1

</llo_original>
